<compile_context>
chip_gen: v5e
topology: v5e:2x2
jax: 0.10.0
libtpu: 0.0.40
codegen_flags: <defaults>
</compile_context>

<pallas_src>
import math

import jax
import jax.numpy as jnp
from jax.experimental import pallas as pl
from jax.experimental.pallas import tpu as pltpu

HEAD_COUNT = 4
MODEL_DIM = 32
DIM_PER_HEAD = MODEL_DIM // HEAD_COUNT


def _mha_kernel(kvq_ref, w_kvq_ref, b_kvq_ref, wo_ref, bo_ref, out_ref, ctx_ref):
    # kvq_ref:  [TB, S, 3D]  (key | value | query concatenated on the feature dim)
    # w_kvq_ref:[3D, 3D] bf16 block-diagonal fused weight (q-scale folded in)
    # b_kvq_ref:[1, 3D] f32, wo_ref:[D, D] bf16, bo_ref:[1, D] f32
    # out_ref:  [TB, S, D]
    # ctx_ref:  [TB, S, D] f32 VMEM scratch (per-head context assembly)
    tb, seq, three_d = kvq_ref.shape
    d = three_d // 3
    dh = d // HEAD_COUNT
    m = tb * seq

    # ---- Fused K/V/Q projection: ONE MXU matmul with M = TB*S rows, N = 3D lanes.
    # Reshape only merges leading dims (lane dim unchanged).
    x = kvq_ref[...].reshape(m, three_d)
    proj = jnp.dot(x.astype(jnp.bfloat16), w_kvq_ref[...],
                   preferred_element_type=jnp.float32) + b_kvq_ref[0]   # [M, 3D] f32

    k3 = proj[:, 0:d].reshape(tb, seq, d)            # [TB, S, D]
    v3 = proj[:, d:2 * d].reshape(tb, seq, d)        # [TB, S, D]
    q3 = proj[:, 2 * d:3 * d].reshape(tb, seq, d)    # [TB, S, D], 1/sqrt(dh) folded in

    # ---- Per-head scaled dot-product attention, batched over the batch tile.
    # Heads own contiguous model-dim slices (matches view(B,S,H,dh).transpose(1,2)).
    for h in range(HEAD_COUNT):
        lo, hi = h * dh, (h + 1) * dh
        qh = q3[:, :, lo:hi]                         # [TB, S, dh]
        kh = k3[:, :, lo:hi]
        vh = v3[:, :, lo:hi]

        scores = jnp.einsum("bqd,bkd->bqk", qh, kh,
                            preferred_element_type=jnp.float32)          # [TB, S, S]
        scores = scores - jnp.max(scores, axis=-1, keepdims=True)
        p = jnp.exp(scores)
        attn = p * pl.reciprocal(jnp.sum(p, axis=-1, keepdims=True), approx=True)
        # dropout: eval mode -> identity.
        ctx_ref[:, :, lo:hi] = jnp.einsum("bqk,bkd->bqd", attn, vh,
                                          preferred_element_type=jnp.float32)

    # ---- Final linear on the assembled context ( == unshape(...) @ W_o + b_o ).
    ctx = ctx_ref[...].reshape(m, d)
    out = jnp.dot(ctx.astype(jnp.bfloat16), wo_ref[...],
                  preferred_element_type=jnp.float32) + bo_ref[0]
    out_ref[...] = out.reshape(tb, seq, d).astype(out_ref.dtype)


def _pick_batch_tile(batch, seq, max_rows=256):
    """Largest divisor TB of `batch` with TB*seq <= max_rows (conservative VMEM /
    MXU-row budget, v7x's 64 MiB VMEM in mind), preferring >= 2 grid steps so
    both v7x TensorCores get work on the 'parallel' batch axis."""
    divisors = [t for t in range(1, batch + 1)
                if batch % t == 0 and t * seq <= max_rows]
    if not divisors:
        return 1
    tb = max(divisors)
    if batch // tb < 2:
        two_step = [t for t in divisors if batch // t >= 2]
        if two_step:
            tb = max(two_step)
    return tb


def multi_headed_attention(key, value, query, params, *, batch_tile=None):
    """key, value, query: [B, S, D] float32. params: output of prepare_params()."""
    B, S, D = key.shape
    assert D == MODEL_DIM
    tb = batch_tile if batch_tile is not None else _pick_batch_tile(B, S)
    assert B % tb == 0

    # Single fused input stream [B, S, 3D]: one input DMA per step, one projection matmul.
    kvq = jnp.concatenate([key, value, query], axis=-1)

    io_in = pl.BlockSpec((tb, S, 3 * D), lambda b: (b, 0, 0))
    io_out = pl.BlockSpec((tb, S, D), lambda b: (b, 0, 0))
    w_kvq_spec = pl.BlockSpec((3 * D, 3 * D), lambda b: (0, 0))
    b_kvq_spec = pl.BlockSpec((1, 3 * D), lambda b: (0, 0))
    wo_spec = pl.BlockSpec((D, D), lambda b: (0, 0))
    bo_spec = pl.BlockSpec((1, D), lambda b: (0, 0))

    return pl.pallas_call(
        _mha_kernel,
        out_shape=jax.ShapeDtypeStruct((B, S, D), query.dtype),
        grid=(B // tb,),
        in_specs=[io_in, w_kvq_spec, b_kvq_spec, wo_spec, bo_spec],
        out_specs=io_out,
        scratch_shapes=[pltpu.VMEM((tb, S, D), jnp.float32)],
        compiler_params=pltpu.CompilerParams(
            dimension_semantics=("parallel",)),
    )(kvq, params["w_kvq"], params["b_kvq"], params["wo"], params["bo"])


def prepare_params(raw):
    """One-time parameter transform:
       * fuse W_k/W_v/W_q into a block-diagonal [3D, 3D] weight (and [1, 3D] bias)
         matching the key|value|query feature concatenation,
       * fold the 1/sqrt(dim_per_head) query scale into W_q / b_q,
       * store the matmul weights in bf16 (f32 accumulation happens in-kernel)."""
    D = MODEL_DIM
    scale = 1.0 / math.sqrt(DIM_PER_HEAD)
    w = jnp.zeros((3 * D, 3 * D), jnp.float32)
    w = w.at[0:D, 0:D].set(raw["wk"])
    w = w.at[D:2 * D, D:2 * D].set(raw["wv"])
    w = w.at[2 * D:3 * D, 2 * D:3 * D].set(raw["wq"] * scale)
    b = jnp.concatenate([raw["bk"], raw["bv"], raw["bq"] * scale], axis=-1)
    return {
        "w_kvq": w.astype(jnp.bfloat16),
        "b_kvq": b,                              # f32, added to the f32 accumulator
        "wo": raw["wo"].astype(jnp.bfloat16),
        "bo": raw["bo"],
    }


def _reference(key, value, query, raw):
    """Pure-JAX reference mirroring the PyTorch forward (no mask/cache/dropout),
    using the raw, unfused f32 parameters."""
    B, S, D = key.shape
    H, dh = HEAD_COUNT, DIM_PER_HEAD

    def lin(x, w, b):
        return x @ w + b[0]

    def shape(x):
        return x.reshape(B, S, H, dh).transpose(0, 2, 1, 3)   # [B, H, S, dh]

    K = shape(lin(key, raw["wk"], raw["bk"]))
    V = shape(lin(value, raw["wv"], raw["bv"]))
    Q = shape(lin(query, raw["wq"], raw["bq"])) / math.sqrt(dh)

    scores = jnp.einsum("bhqd,bhkd->bhqk", Q, K)
    attn = jax.nn.softmax(scores, axis=-1)
    ctx = jnp.einsum("bhqk,bhkd->bhqd", attn, V)
    ctx = ctx.transpose(0, 2, 1, 3).reshape(B, S, D)
    return lin(ctx, raw["wo"], raw["bo"])


def _init_params(rng):
    """Deterministic nn.Linear-style init: U(-1/sqrt(in), 1/sqrt(in)).
    Weights stored as [in, out] (pre-transposed vs. PyTorch's [out, in])."""
    D = MODEL_DIM
    bound = 1.0 / math.sqrt(D)
    params = {}
    for name in ("k", "v", "q", "o"):
        rng, kw, kb = jax.random.split(rng, 3)
        params[f"w{name}"] = jax.random.uniform(
            kw, (D, D), jnp.float32, -bound, bound)
        params[f"b{name}"] = jax.random.uniform(
            kb, (1, D), jnp.float32, -bound, bound)
    return params


if __name__ == "__main__":
    B, S, D = 8, 8, MODEL_DIM
    root = jax.random.PRNGKey(0)
    k_p, k_key, k_val, k_qry = jax.random.split(root, 4)

    raw_params = _init_params(k_p)
    params = prepare_params(raw_params)

    key = jax.random.normal(k_key, (B, S, D), jnp.float32)
    value = jax.random.normal(k_val, (B, S, D), jnp.float32)
    query = jax.random.normal(k_qry, (B, S, D), jnp.float32)

    out = multi_headed_attention(key, value, query, params)
    out = jax.block_until_ready(out)

    ref = _reference(key, value, query, raw_params)
    assert out.shape == (B, S, D)
    max_err = float(jnp.max(jnp.abs(out - ref)))
    # bf16 matmul operands + approx-reciprocal softmax -> looser tolerance than
    # an all-f32 implementation (observed errors well under 3e-2).
    assert jnp.allclose(out, ref, atol=3e-2, rtol=3e-2), f"max abs err {max_err}"

    print("KERNEL_OK")
</pallas_src>

<mosaic_0001>
module attributes {stable_mosaic.version = 11 : i64} {
  func.func @_mha_kernel(%arg0: i32, %arg1: memref<4x8x96xf32, #tpu.memory_space<vmem>>, %arg2: memref<96x96xbf16, #tpu.memory_space<vmem>>, %arg3: memref<1x96xf32, #tpu.memory_space<vmem>>, %arg4: memref<32x32xbf16, #tpu.memory_space<vmem>>, %arg5: memref<1x32xf32, #tpu.memory_space<vmem>>, %arg6: memref<4x8x32xf32, #tpu.memory_space<vmem>>, %arg7: memref<4x8x32xf32, #tpu.memory_space<vmem>>) attributes {dimension_semantics = [#tpu.dimension_semantics<parallel>], iteration_bounds = array<i64: 2>, scalar_prefetch = 0 : i64, scratch_operands = 1 : i64, tpu.core_type = #tpu.core_type<tc>, window_params = [{transform_indices = @transform_0, window_bounds = array<i64: 4, 8, 96>}, {pipeline_mode = #tpu.pipeline_mode<synchronous>, transform_indices = @transform_1, window_bounds = array<i64: 96, 96>}, {pipeline_mode = #tpu.pipeline_mode<synchronous>, transform_indices = @transform_2, window_bounds = array<i64: 1, 96>}, {pipeline_mode = #tpu.pipeline_mode<synchronous>, transform_indices = @transform_3, window_bounds = array<i64: 32, 32>}, {pipeline_mode = #tpu.pipeline_mode<synchronous>, transform_indices = @transform_4, window_bounds = array<i64: 1, 32>}, {transform_indices = @transform_5, window_bounds = array<i64: 4, 8, 32>}]} {
    %c0 = arith.constant 0 : index
    %c0_0 = arith.constant 0 : index
    %c0_1 = arith.constant 0 : index
    %0 = vector.load %arg1[%c0, %c0_0, %c0_1] : memref<4x8x96xf32, #tpu.memory_space<vmem>>, vector<4x8x96xf32>
    %1 = vector.shape_cast %0 : vector<4x8x96xf32> to vector<32x96xf32>
    %2 = arith.truncf %1 : vector<32x96xf32> to vector<32x96xbf16>
    %c0_2 = arith.constant 0 : index
    %c0_3 = arith.constant 0 : index
    %3 = vector.load %arg2[%c0_2, %c0_3] : memref<96x96xbf16, #tpu.memory_space<vmem>>, vector<96x96xbf16>
    %cst = arith.constant dense<0.000000e+00> : vector<32x96xf32>
    %4 = tpu.matmul %2, %3, %cst {dimension_numbers = #tpu.dot_dimension_numbers<[1], [0], [0], [1], [0, 0, 1, 1], [], []>} : vector<32x96xbf16>, vector<96x96xbf16>, vector<32x96xf32> -> vector<32x96xf32>
    %c0_4 = arith.constant 0 : index
    %c0_5 = arith.constant 0 : index
    %5 = vector.load %arg3[%c0_4, %c0_5] : memref<1x96xf32, #tpu.memory_space<vmem>>, vector<1x96xf32>
    %6 = vector.shape_cast %5 : vector<1x96xf32> to vector<96xf32>
    %7 = vector.shape_cast %6 : vector<96xf32> to vector<1x96xf32>
    %8 = vector.broadcast %7 : vector<1x96xf32> to vector<32x96xf32>
    %9 = arith.addf %4, %8 : vector<32x96xf32>
    %10 = vector.extract_strided_slice %9 {offsets = [0, 0], sizes = [32, 32], strides = [1, 1]} : vector<32x96xf32> to vector<32x32xf32>
    %11 = vector.shape_cast %10 : vector<32x32xf32> to vector<4x8x32xf32>
    %12 = vector.extract_strided_slice %9 {offsets = [0, 32], sizes = [32, 32], strides = [1, 1]} : vector<32x96xf32> to vector<32x32xf32>
    %13 = vector.shape_cast %12 : vector<32x32xf32> to vector<4x8x32xf32>
    %14 = vector.extract_strided_slice %9 {offsets = [0, 64], sizes = [32, 32], strides = [1, 1]} : vector<32x96xf32> to vector<32x32xf32>
    %15 = vector.shape_cast %14 : vector<32x32xf32> to vector<4x8x32xf32>
    %16 = vector.extract_strided_slice %15 {offsets = [0, 0, 0], sizes = [4, 8, 8], strides = [1, 1, 1]} : vector<4x8x32xf32> to vector<4x8x8xf32>
    %17 = vector.extract_strided_slice %11 {offsets = [0, 0, 0], sizes = [4, 8, 8], strides = [1, 1, 1]} : vector<4x8x32xf32> to vector<4x8x8xf32>
    %18 = vector.extract_strided_slice %13 {offsets = [0, 0, 0], sizes = [4, 8, 8], strides = [1, 1, 1]} : vector<4x8x32xf32> to vector<4x8x8xf32>
    "tpu.trace_start"() <{level = 10 : i32, message = "bqd,bkd->bqk"}> : () -> ()
    %cst_6 = arith.constant dense<0.000000e+00> : vector<4x8x8xf32>
    %19 = tpu.matmul %16, %17, %cst_6 {dimension_numbers = #tpu.dot_dimension_numbers<[2], [2], [1], [1], [0, 0, 0, 1, 1, 1], [0], [0]>} : vector<4x8x8xf32>, vector<4x8x8xf32>, vector<4x8x8xf32> -> vector<4x8x8xf32>
    "tpu.trace_stop"() : () -> ()
    %cst_7 = arith.constant dense<0xFF800000> : vector<4x8xf32>
    %20 = vector.multi_reduction <maximumf>, %19, %cst_7 [2] : vector<4x8x8xf32> to vector<4x8xf32>
    %21 = vector.shape_cast %20 : vector<4x8xf32> to vector<4x8x1xf32>
    %22 = vector.broadcast %21 : vector<4x8x1xf32> to vector<4x8x8xf32>
    %23 = arith.subf %19, %22 : vector<4x8x8xf32>
    %24 = math.exp %23 : vector<4x8x8xf32>
    %cst_8 = arith.constant dense<0.000000e+00> : vector<4x8xf32>
    %25 = vector.multi_reduction <add>, %24, %cst_8 [2] : vector<4x8x8xf32> to vector<4x8xf32>
    %26 = vector.shape_cast %25 : vector<4x8xf32> to vector<4x8x1xf32>
    %27 = tpu.reciprocal %26 {approx = true} : vector<4x8x1xf32> -> vector<4x8x1xf32>
    %28 = vector.broadcast %27 : vector<4x8x1xf32> to vector<4x8x8xf32>
    %29 = arith.mulf %24, %28 : vector<4x8x8xf32>
    "tpu.trace_start"() <{level = 10 : i32, message = "bqk,bkd->bqd"}> : () -> ()
    %cst_9 = arith.constant dense<0.000000e+00> : vector<4x8x8xf32>
    %30 = tpu.matmul %29, %18, %cst_9 {dimension_numbers = #tpu.dot_dimension_numbers<[2], [1], [1], [2], [0, 0, 0, 1, 1, 2], [0], [0]>} : vector<4x8x8xf32>, vector<4x8x8xf32>, vector<4x8x8xf32> -> vector<4x8x8xf32>
    "tpu.trace_stop"() : () -> ()
    %c0_10 = arith.constant 0 : index
    %c0_11 = arith.constant 0 : index
    %c0_12 = arith.constant 0 : index
    %31 = vector.load %arg7[%c0_10, %c0_11, %c0_12] : memref<4x8x32xf32, #tpu.memory_space<vmem>>, vector<4x8x8xf32>
    tpu.vector_store %arg7[%c0_10, %c0_11, %c0_12], %30 {strides = array<i32>} : memref<4x8x32xf32, #tpu.memory_space<vmem>>, vector<4x8x8xf32>,
    %32 = vector.extract_strided_slice %15 {offsets = [0, 0, 8], sizes = [4, 8, 8], strides = [1, 1, 1]} : vector<4x8x32xf32> to vector<4x8x8xf32>
    %33 = vector.extract_strided_slice %11 {offsets = [0, 0, 8], sizes = [4, 8, 8], strides = [1, 1, 1]} : vector<4x8x32xf32> to vector<4x8x8xf32>
    %34 = vector.extract_strided_slice %13 {offsets = [0, 0, 8], sizes = [4, 8, 8], strides = [1, 1, 1]} : vector<4x8x32xf32> to vector<4x8x8xf32>
    "tpu.trace_start"() <{level = 10 : i32, message = "bqd,bkd->bqk"}> : () -> ()
    %cst_13 = arith.constant dense<0.000000e+00> : vector<4x8x8xf32>
    %35 = tpu.matmul %32, %33, %cst_13 {dimension_numbers = #tpu.dot_dimension_numbers<[2], [2], [1], [1], [0, 0, 0, 1, 1, 1], [0], [0]>} : vector<4x8x8xf32>, vector<4x8x8xf32>, vector<4x8x8xf32> -> vector<4x8x8xf32>
    "tpu.trace_stop"() : () -> ()
    %cst_14 = arith.constant dense<0xFF800000> : vector<4x8xf32>
    %36 = vector.multi_reduction <maximumf>, %35, %cst_14 [2] : vector<4x8x8xf32> to vector<4x8xf32>
    %37 = vector.shape_cast %36 : vector<4x8xf32> to vector<4x8x1xf32>
    %38 = vector.broadcast %37 : vector<4x8x1xf32> to vector<4x8x8xf32>
    %39 = arith.subf %35, %38 : vector<4x8x8xf32>
    %40 = math.exp %39 : vector<4x8x8xf32>
    %cst_15 = arith.constant dense<0.000000e+00> : vector<4x8xf32>
    %41 = vector.multi_reduction <add>, %40, %cst_15 [2] : vector<4x8x8xf32> to vector<4x8xf32>
    %42 = vector.shape_cast %41 : vector<4x8xf32> to vector<4x8x1xf32>
    %43 = tpu.reciprocal %42 {approx = true} : vector<4x8x1xf32> -> vector<4x8x1xf32>
    %44 = vector.broadcast %43 : vector<4x8x1xf32> to vector<4x8x8xf32>
    %45 = arith.mulf %40, %44 : vector<4x8x8xf32>
    "tpu.trace_start"() <{level = 10 : i32, message = "bqk,bkd->bqd"}> : () -> ()
    %cst_16 = arith.constant dense<0.000000e+00> : vector<4x8x8xf32>
    %46 = tpu.matmul %45, %34, %cst_16 {dimension_numbers = #tpu.dot_dimension_numbers<[2], [1], [1], [2], [0, 0, 0, 1, 1, 2], [0], [0]>} : vector<4x8x8xf32>, vector<4x8x8xf32>, vector<4x8x8xf32> -> vector<4x8x8xf32>
    "tpu.trace_stop"() : () -> ()
    %c0_17 = arith.constant 0 : index
    %c0_18 = arith.constant 0 : index
    %c8 = arith.constant 8 : index
    %47 = vector.load %arg7[%c0_17, %c0_18, %c8] : memref<4x8x32xf32, #tpu.memory_space<vmem>>, vector<4x8x8xf32>
    tpu.vector_store %arg7[%c0_17, %c0_18, %c8], %46 {strides = array<i32>} : memref<4x8x32xf32, #tpu.memory_space<vmem>>, vector<4x8x8xf32>,
    %48 = vector.extract_strided_slice %15 {offsets = [0, 0, 16], sizes = [4, 8, 8], strides = [1, 1, 1]} : vector<4x8x32xf32> to vector<4x8x8xf32>
    %49 = vector.extract_strided_slice %11 {offsets = [0, 0, 16], sizes = [4, 8, 8], strides = [1, 1, 1]} : vector<4x8x32xf32> to vector<4x8x8xf32>
    %50 = vector.extract_strided_slice %13 {offsets = [0, 0, 16], sizes = [4, 8, 8], strides = [1, 1, 1]} : vector<4x8x32xf32> to vector<4x8x8xf32>
    "tpu.trace_start"() <{level = 10 : i32, message = "bqd,bkd->bqk"}> : () -> ()
    %cst_19 = arith.constant dense<0.000000e+00> : vector<4x8x8xf32>
    %51 = tpu.matmul %48, %49, %cst_19 {dimension_numbers = #tpu.dot_dimension_numbers<[2], [2], [1], [1], [0, 0, 0, 1, 1, 1], [0], [0]>} : vector<4x8x8xf32>, vector<4x8x8xf32>, vector<4x8x8xf32> -> vector<4x8x8xf32>
    "tpu.trace_stop"() : () -> ()
    %cst_20 = arith.constant dense<0xFF800000> : vector<4x8xf32>
    %52 = vector.multi_reduction <maximumf>, %51, %cst_20 [2] : vector<4x8x8xf32> to vector<4x8xf32>
    %53 = vector.shape_cast %52 : vector<4x8xf32> to vector<4x8x1xf32>
    %54 = vector.broadcast %53 : vector<4x8x1xf32> to vector<4x8x8xf32>
    %55 = arith.subf %51, %54 : vector<4x8x8xf32>
    %56 = math.exp %55 : vector<4x8x8xf32>
    %cst_21 = arith.constant dense<0.000000e+00> : vector<4x8xf32>
    %57 = vector.multi_reduction <add>, %56, %cst_21 [2] : vector<4x8x8xf32> to vector<4x8xf32>
    %58 = vector.shape_cast %57 : vector<4x8xf32> to vector<4x8x1xf32>
    %59 = tpu.reciprocal %58 {approx = true} : vector<4x8x1xf32> -> vector<4x8x1xf32>
    %60 = vector.broadcast %59 : vector<4x8x1xf32> to vector<4x8x8xf32>
    %61 = arith.mulf %56, %60 : vector<4x8x8xf32>
    "tpu.trace_start"() <{level = 10 : i32, message = "bqk,bkd->bqd"}> : () -> ()
    %cst_22 = arith.constant dense<0.000000e+00> : vector<4x8x8xf32>
    %62 = tpu.matmul %61, %50, %cst_22 {dimension_numbers = #tpu.dot_dimension_numbers<[2], [1], [1], [2], [0, 0, 0, 1, 1, 2], [0], [0]>} : vector<4x8x8xf32>, vector<4x8x8xf32>, vector<4x8x8xf32> -> vector<4x8x8xf32>
    "tpu.trace_stop"() : () -> ()
    %c0_23 = arith.constant 0 : index
    %c0_24 = arith.constant 0 : index
    %c16 = arith.constant 16 : index
    %63 = vector.load %arg7[%c0_23, %c0_24, %c16] : memref<4x8x32xf32, #tpu.memory_space<vmem>>, vector<4x8x8xf32>
    tpu.vector_store %arg7[%c0_23, %c0_24, %c16], %62 {strides = array<i32>} : memref<4x8x32xf32, #tpu.memory_space<vmem>>, vector<4x8x8xf32>,
    %64 = vector.extract_strided_slice %15 {offsets = [0, 0, 24], sizes = [4, 8, 8], strides = [1, 1, 1]} : vector<4x8x32xf32> to vector<4x8x8xf32>
    %65 = vector.extract_strided_slice %11 {offsets = [0, 0, 24], sizes = [4, 8, 8], strides = [1, 1, 1]} : vector<4x8x32xf32> to vector<4x8x8xf32>
    %66 = vector.extract_strided_slice %13 {offsets = [0, 0, 24], sizes = [4, 8, 8], strides = [1, 1, 1]} : vector<4x8x32xf32> to vector<4x8x8xf32>
    "tpu.trace_start"() <{level = 10 : i32, message = "bqd,bkd->bqk"}> : () -> ()
    %cst_25 = arith.constant dense<0.000000e+00> : vector<4x8x8xf32>
    %67 = tpu.matmul %64, %65, %cst_25 {dimension_numbers = #tpu.dot_dimension_numbers<[2], [2], [1], [1], [0, 0, 0, 1, 1, 1], [0], [0]>} : vector<4x8x8xf32>, vector<4x8x8xf32>, vector<4x8x8xf32> -> vector<4x8x8xf32>
    "tpu.trace_stop"() : () -> ()
    %cst_26 = arith.constant dense<0xFF800000> : vector<4x8xf32>
    %68 = vector.multi_reduction <maximumf>, %67, %cst_26 [2] : vector<4x8x8xf32> to vector<4x8xf32>
    %69 = vector.shape_cast %68 : vector<4x8xf32> to vector<4x8x1xf32>
    %70 = vector.broadcast %69 : vector<4x8x1xf32> to vector<4x8x8xf32>
    %71 = arith.subf %67, %70 : vector<4x8x8xf32>
    %72 = math.exp %71 : vector<4x8x8xf32>
    %cst_27 = arith.constant dense<0.000000e+00> : vector<4x8xf32>
    %73 = vector.multi_reduction <add>, %72, %cst_27 [2] : vector<4x8x8xf32> to vector<4x8xf32>
    %74 = vector.shape_cast %73 : vector<4x8xf32> to vector<4x8x1xf32>
    %75 = tpu.reciprocal %74 {approx = true} : vector<4x8x1xf32> -> vector<4x8x1xf32>
    %76 = vector.broadcast %75 : vector<4x8x1xf32> to vector<4x8x8xf32>
    %77 = arith.mulf %72, %76 : vector<4x8x8xf32>
    "tpu.trace_start"() <{level = 10 : i32, message = "bqk,bkd->bqd"}> : () -> ()
    %cst_28 = arith.constant dense<0.000000e+00> : vector<4x8x8xf32>
    %78 = tpu.matmul %77, %66, %cst_28 {dimension_numbers = #tpu.dot_dimension_numbers<[2], [1], [1], [2], [0, 0, 0, 1, 1, 2], [0], [0]>} : vector<4x8x8xf32>, vector<4x8x8xf32>, vector<4x8x8xf32> -> vector<4x8x8xf32>
    "tpu.trace_stop"() : () -> ()
    %c0_29 = arith.constant 0 : index
    %c0_30 = arith.constant 0 : index
    %c24 = arith.constant 24 : index
    %79 = vector.load %arg7[%c0_29, %c0_30, %c24] : memref<4x8x32xf32, #tpu.memory_space<vmem>>, vector<4x8x8xf32>
    tpu.vector_store %arg7[%c0_29, %c0_30, %c24], %78 {strides = array<i32>} : memref<4x8x32xf32, #tpu.memory_space<vmem>>, vector<4x8x8xf32>,
    %c0_31 = arith.constant 0 : index
    %c0_32 = arith.constant 0 : index
    %c0_33 = arith.constant 0 : index
    %80 = vector.load %arg7[%c0_31, %c0_32, %c0_33] : memref<4x8x32xf32, #tpu.memory_space<vmem>>, vector<4x8x32xf32>
    %81 = vector.shape_cast %80 : vector<4x8x32xf32> to vector<32x32xf32>
    %82 = arith.truncf %81 : vector<32x32xf32> to vector<32x32xbf16>
    %c0_34 = arith.constant 0 : index
    %c0_35 = arith.constant 0 : index
    %83 = vector.load %arg4[%c0_34, %c0_35] : memref<32x32xbf16, #tpu.memory_space<vmem>>, vector<32x32xbf16>
    %cst_36 = arith.constant dense<0.000000e+00> : vector<32x32xf32>
    %84 = tpu.matmul %82, %83, %cst_36 {dimension_numbers = #tpu.dot_dimension_numbers<[1], [0], [0], [1], [0, 0, 1, 1], [], []>} : vector<32x32xbf16>, vector<32x32xbf16>, vector<32x32xf32> -> vector<32x32xf32>
    %c0_37 = arith.constant 0 : index
    %c0_38 = arith.constant 0 : index
    %85 = vector.load %arg5[%c0_37, %c0_38] : memref<1x32xf32, #tpu.memory_space<vmem>>, vector<1x32xf32>
    %86 = vector.shape_cast %85 : vector<1x32xf32> to vector<32xf32>
    %87 = vector.shape_cast %86 : vector<32xf32> to vector<1x32xf32>
    %88 = vector.broadcast %87 : vector<1x32xf32> to vector<32x32xf32>
    %89 = arith.addf %84, %88 : vector<32x32xf32>
    %90 = vector.shape_cast %89 : vector<32x32xf32> to vector<4x8x32xf32>
    %c0_39 = arith.constant 0 : index
    %c0_40 = arith.constant 0 : index
    %c0_41 = arith.constant 0 : index
    %91 = vector.load %arg6[%c0_39, %c0_40, %c0_41] : memref<4x8x32xf32, #tpu.memory_space<vmem>>, vector<4x8x32xf32>
    tpu.vector_store %arg6[%c0_39, %c0_40, %c0_41], %90 {strides = array<i32>} : memref<4x8x32xf32, #tpu.memory_space<vmem>>, vector<4x8x32xf32>,
    return
  }
  func.func @transform_0(%arg0: i32) -> (i32, i32, i32) {
    %c0_i32 = arith.constant 0 : i32
    %c0_i32_0 = arith.constant 0 : i32
    %c0_i32_1 = arith.constant 0 : i32
    return %arg0, %c0_i32, %c0_i32_0 : i32, i32, i32
  }
  func.func @transform_1(%arg0: i32) -> (i32, i32) {
    %c0_i32 = arith.constant 0 : i32
    %c0_i32_0 = arith.constant 0 : i32
    %c0_i32_1 = arith.constant 0 : i32
    return %c0_i32, %c0_i32_0 : i32, i32
  }
  func.func @transform_2(%arg0: i32) -> (i32, i32) {
    %c0_i32 = arith.constant 0 : i32
    %c0_i32_0 = arith.constant 0 : i32
    %c0_i32_1 = arith.constant 0 : i32
    return %c0_i32, %c0_i32_0 : i32, i32
  }
  func.func @transform_3(%arg0: i32) -> (i32, i32) {
    %c0_i32 = arith.constant 0 : i32
    %c0_i32_0 = arith.constant 0 : i32
    %c0_i32_1 = arith.constant 0 : i32
    return %c0_i32, %c0_i32_0 : i32, i32
  }
  func.func @transform_4(%arg0: i32) -> (i32, i32) {
    %c0_i32 = arith.constant 0 : i32
    %c0_i32_0 = arith.constant 0 : i32
    %c0_i32_1 = arith.constant 0 : i32
    return %c0_i32, %c0_i32_0 : i32, i32
  }
  func.func @transform_5(%arg0: i32) -> (i32, i32, i32) {
    %c0_i32 = arith.constant 0 : i32
    %c0_i32_0 = arith.constant 0 : i32
    %c0_i32_1 = arith.constant 0 : i32
    return %arg0, %c0_i32, %c0_i32_0 : i32, i32, i32
  }
}

</mosaic_0001>

<llo_original>
// kernel: tpu_custom_call.1
$region0: #{tpu_custom_call.1}
  #allocation0 [shape = 'u32[]', space=smem, size = 0x4, offset = 0x4, fixed_abs, tag = 'smem constant byte address 0x4 - core index']
  #allocation1 [shape = 'u32[72,128]{1,0:T(1,128)}', space=vmem, size = 0x9000, scoped, tag = 'internal scratch']
  #allocation2 [shape = 'f32[4,8,32]{2,1,0:T(8,128)}', space=vmem, size = 0x4000, scoped, tag = 'scratch operand']
  %s0 = inlined_call_operand.hbm [shape: f32[8,8,96], index: 0, kind: input, shape index: {}]
  %s1 = inlined_call_operand.hbm [shape: bf16[96,96], index: 1, kind: input, shape index: {}]
  %s2 = inlined_call_operand.vmem [shape: f32[1,96], index: 2, kind: input, shape index: {}]
  %s3 = inlined_call_operand.hbm [shape: bf16[32,32], index: 3, kind: input, shape index: {}]
  %s4 = inlined_call_operand.vmem [shape: f32[1,32], index: 4, kind: input, shape index: {}]
  %s5 = inlined_call_operand.hbm [shape: f32[8,8,32], index: 5, kind: output, shape index: {}]
  %s6 = sld [smem:[#allocation0]]
  $region65: #{tpu_custom_call.1} parent=0
    _
  %s8 = ssub.s32 1, %s6
  %s9 = scalar_select 0, %s8, %s6
  $region1: #{tpu_custom_call.1} parent=0
    #allocation3 [shape = 'u8[32768]{0}', space=vmem, size = 0x8000, scoped, tag = 'input window, operand 0']
    #allocation4 [shape = 's32[2]{0}', space=sflag, size = 0x8, scoped, tag = 'scoped memory for tpu_custom_call.1']
    #allocation5 [shape = 's32[2]{0}', space=sflag, size = 0x8, scoped, tag = 'scoped memory for tpu_custom_call.1']
    #allocation6 [shape = 'u8[24576]{0}', space=vmem, size = 0x6000, scoped, tag = 'input window, operand 1, single buffered']
    #allocation7 [shape = 's32[1]{0}', space=sflag, size = 0x4, scoped, tag = 'scoped memory for tpu_custom_call.1']
    #allocation8 [shape = 'u8[8192]{0}', space=vmem, size = 0x2000, scoped, tag = 'input window, operand 3, single buffered']
    #allocation9 [shape = 'u8[32768]{0}', space=vmem, size = 0x8000, scoped, tag = 'output window, operand 0']
    %10 = vsyncpa [#allocation4], 0
    %s11 = scalar_lea.sflag [#allocation4], 1
    %12 = vsyncpa %s11, 0
    %13 = vsyncpa [#allocation7], 0
    %14 = vsyncpa [#allocation5], 0
    %s15 = scalar_lea.sflag [#allocation5], 1
    %16 = vsyncpa %s15, 0
    loop: start=0, step=1, limit=4
    $region2: #{tpu_custom_call.1} parent=1 // loop_pre_header
      _
    $region3: #{tpu_custom_call.1} parent=1 // loop_header
      %s18 = sphi 0, %s22
      %p19 = scmp.ge.s32.totalorder %s18, 4
      %s28 = sphi 0, %s30
      %s31 = sphi 0, %s28
      %s32 = sphi 0, %s31
      %s48 = sphi 0, %s32
      %s52 = sphi 0, %s52
      %s54 = sphi 0, %s52
      %s55 = sphi 0, %s54
      %s69 = sphi 0, %s55
      %s73 = sphi 0, %s73
      %s75 = sphi 0, %s73
      %s76 = sphi 0, %s75
      %s90 = sphi 0, %s76
      %s94 = sphi 0, %s94
      %s96 = sphi 0, %s94
      %s97 = sphi 0, %s96
      %s111 = sphi 0, %s97
      %s115 = sphi 0, %s115
      %s117 = sphi 0, %s115
      %s118 = sphi 0, %s117
      %s132 = sphi 0, %s118
      %s138 = sphi 0, %s140
      %s141 = sphi 0, %s138
      %s142 = sphi 0, %s141
      %s158 = sphi 0, %s142
    $region4: #{tpu_custom_call.1} parent=1 // loop_header_branch
      %21 = sbr.rel (%p19) target = $region8
    $region5: #{tpu_custom_call.1} parent=1 // loop_body
      %s23 = ssub.s32 %s18, 1
      %s24 = ssub.s32 %s18, 2
      %s25 = sadd.s32 %s18, 1
      %s26 = ssub.s32 %s18, %s25
      %p27 = scmp.eq.s32.totalorder %s26, 0
      %s29 = sadd.s32 %s28, 1
      %s30 = scalar_select %p27, %s28, %s29
      %p33 = pneg %p27
      %p34 = scmp.eq.s32.totalorder %s18, 1
      %p35 = por %p33, %p34
      %p36 = scmp.ne.s32.totalorder %s28, %s31
      %p37 = scmp.eq.s32.totalorder %s18, 0
      %p38 = por %p36, %p37
      %p39 = scmp.ne.s32.totalorder %s28, %s31
      %p40 = scmp.eq.s32.totalorder %s23, 1
      %p41 = por %p39, %p40
      %p42 = scmp.ne.s32.totalorder %s31, %s32
      %p43 = scmp.eq.s32.totalorder %s23, 0
      %p44 = por %p42, %p43
      %p45 = scmp.ne.s32.totalorder %s31, %s32
      %p46 = scmp.eq.s32.totalorder %s24, 1
      %p47 = por %p45, %p46
      %p49 = scmp.ne.s32.totalorder %s32, %s48
      %p50 = scmp.eq.s32.totalorder %s24, 0
      %p51 = por %p49, %p50
      %s53 = sadd.s32 %s52, 1
      %p56 = scmp.eq.s32.totalorder %s18, 1
      %p57 = scmp.ne.s32.totalorder %s52, %s54
      %p58 = scmp.eq.s32.totalorder %s18, 0
      %p59 = por %p57, %p58
      %p60 = scmp.ne.s32.totalorder %s52, %s54
      %p61 = scmp.eq.s32.totalorder %s23, 1
      %p62 = por %p60, %p61
      %p63 = scmp.ne.s32.totalorder %s54, %s55
      %p64 = scmp.eq.s32.totalorder %s23, 0
      %p65 = por %p63, %p64
      %p66 = scmp.ne.s32.totalorder %s54, %s55
      %p67 = scmp.eq.s32.totalorder %s24, 1
      %p68 = por %p66, %p67
      %p70 = scmp.ne.s32.totalorder %s55, %s69
      %p71 = scmp.eq.s32.totalorder %s24, 0
      %p72 = por %p70, %p71
      %s74 = sadd.s32 %s73, 1
      %p77 = scmp.eq.s32.totalorder %s18, 1
      %p78 = scmp.ne.s32.totalorder %s73, %s75
      %p79 = scmp.eq.s32.totalorder %s18, 0
      %p80 = por %p78, %p79
      %p81 = scmp.ne.s32.totalorder %s73, %s75
      %p82 = scmp.eq.s32.totalorder %s23, 1
      %p83 = por %p81, %p82
      %p84 = scmp.ne.s32.totalorder %s75, %s76
      %p85 = scmp.eq.s32.totalorder %s23, 0
      %p86 = por %p84, %p85
      %p87 = scmp.ne.s32.totalorder %s75, %s76
      %p88 = scmp.eq.s32.totalorder %s24, 1
      %p89 = por %p87, %p88
      %p91 = scmp.ne.s32.totalorder %s76, %s90
      %p92 = scmp.eq.s32.totalorder %s24, 0
      %p93 = por %p91, %p92
      %s95 = sadd.s32 %s94, 1
      %p98 = scmp.eq.s32.totalorder %s18, 1
      %p99 = scmp.ne.s32.totalorder %s94, %s96
      %p100 = scmp.eq.s32.totalorder %s18, 0
      %p101 = por %p99, %p100
      %p102 = scmp.ne.s32.totalorder %s94, %s96
      %p103 = scmp.eq.s32.totalorder %s23, 1
      %p104 = por %p102, %p103
      %p105 = scmp.ne.s32.totalorder %s96, %s97
      %p106 = scmp.eq.s32.totalorder %s23, 0
      %p107 = por %p105, %p106
      %p108 = scmp.ne.s32.totalorder %s96, %s97
      %p109 = scmp.eq.s32.totalorder %s24, 1
      %p110 = por %p108, %p109
      %p112 = scmp.ne.s32.totalorder %s97, %s111
      %p113 = scmp.eq.s32.totalorder %s24, 0
      %p114 = por %p112, %p113
      %s116 = sadd.s32 %s115, 1
      %p119 = scmp.eq.s32.totalorder %s18, 1
      %p120 = scmp.ne.s32.totalorder %s115, %s117
      %p121 = scmp.eq.s32.totalorder %s18, 0
      %p122 = por %p120, %p121
      %p123 = scmp.ne.s32.totalorder %s115, %s117
      %p124 = scmp.eq.s32.totalorder %s23, 1
      %p125 = por %p123, %p124
      %p126 = scmp.ne.s32.totalorder %s117, %s118
      %p127 = scmp.eq.s32.totalorder %s23, 0
      %p128 = por %p126, %p127
      %p129 = scmp.ne.s32.totalorder %s117, %s118
      %p130 = scmp.eq.s32.totalorder %s24, 1
      %p131 = por %p129, %p130
      %p133 = scmp.ne.s32.totalorder %s118, %s132
      %p134 = scmp.eq.s32.totalorder %s24, 0
      %p135 = por %p133, %p134
      %s136 = ssub.s32 %s18, %s25
      %p137 = scmp.eq.s32.totalorder %s136, 0
      %s139 = sadd.s32 %s138, 1
      %s140 = scalar_select %p137, %s138, %s139
      %p143 = pneg %p137
      %p144 = scmp.eq.s32.totalorder %s18, 1
      %p145 = por %p143, %p144
      %p146 = scmp.ne.s32.totalorder %s138, %s141
      %p147 = scmp.eq.s32.totalorder %s18, 0
      %p148 = por %p146, %p147
      %p149 = scmp.ne.s32.totalorder %s138, %s141
      %p150 = scmp.eq.s32.totalorder %s23, 1
      %p151 = por %p149, %p150
      %p152 = scmp.ne.s32.totalorder %s141, %s142
      %p153 = scmp.eq.s32.totalorder %s23, 0
      %p154 = por %p152, %p153
      %p155 = scmp.ne.s32.totalorder %s141, %s142
      %p156 = scmp.eq.s32.totalorder %s24, 1
      %p157 = por %p155, %p156
      %p159 = scmp.ne.s32.totalorder %s142, %s158
      %p160 = scmp.eq.s32.totalorder %s24, 0
      %p161 = por %p159, %p160
      %p162 = scmp.le.s32.totalorder 1, %s18
      %p163 = scmp.lt.s32.totalorder %s18, 3
      %p164 = pnand %p162, %p163
      %p165 = pneg %p164
      // Predicated region
      $region9: #{tpu_custom_call.1} parent=5 // pred_check
        _
      $region10: #{tpu_custom_call.1} parent=5 // pred_check_branch
        %167 = sbr.rel (%p164) target = $region12
      $region11: #{tpu_custom_call.1} parent=5 // pred_region
        %s168 = ssub.s32 %s18, 1
        // Predicated region
        $region13: #{tpu_custom_call.1} parent=11 // pred_check
          %p169 = pneg %p65
        $region14: #{tpu_custom_call.1} parent=11 // pred_check_branch
          %171 = sbr.rel (%p169) target = $region16
        $region15: #{tpu_custom_call.1} parent=11 // pred_region
          %173 = vsyncadd [#allocation7], 0
          %s174 = sshll.u32 %s1, 4
          %s175 = int_to_ptr.hbm [resolvable:$true] %s174
          %s176 = sshll.u32 [#allocation6], 4
          %s177 = int_to_ptr.vmem [resolvable:$true] %s176
          %182 = dma.hbm_to_vmem [thread:$0]  %s175, 768, %s177, [#allocation7], 64, 64, 4
        $region16: #{tpu_custom_call.1} parent=11 // pred_fallthru
          _
        // Predicated region
        $region17: #{tpu_custom_call.1} parent=11 // pred_check
          %p183 = pneg %p86
        $region18: #{tpu_custom_call.1} parent=11 // pred_check_branch
          %185 = sbr.rel (%p183) target = $region20
        $region19: #{tpu_custom_call.1} parent=11 // pred_region
          _
        $region20: #{tpu_custom_call.1} parent=11 // pred_fallthru
          _
        // Predicated region
        $region21: #{tpu_custom_call.1} parent=11 // pred_check
          %p186 = pneg %p107
        $region22: #{tpu_custom_call.1} parent=11 // pred_check_branch
          %188 = sbr.rel (%p186) target = $region24
        $region23: #{tpu_custom_call.1} parent=11 // pred_region
          %190 = vsyncadd [#allocation7], 0
          %s191 = sshll.u32 %s3, 4
          %s192 = int_to_ptr.hbm [resolvable:$true] %s191
          %s193 = sshll.u32 [#allocation8], 4
          %s194 = int_to_ptr.vmem [resolvable:$true] %s193
          %199 = dma.hbm_to_vmem [thread:$0]  %s192, 256, %s194, [#allocation7], 64, 64, 4
        $region24: #{tpu_custom_call.1} parent=11 // pred_fallthru
          _
        // Predicated region
        $region25: #{tpu_custom_call.1} parent=11 // pred_check
          %p200 = pneg %p128
        $region26: #{tpu_custom_call.1} parent=11 // pred_check_branch
          %202 = sbr.rel (%p200) target = $region28
        $region27: #{tpu_custom_call.1} parent=11 // pred_region
          _
        $region28: #{tpu_custom_call.1} parent=11 // pred_fallthru
          _
      $region12: #{tpu_custom_call.1} parent=5 // pred_fallthru
        _
      %p203 = scmp.lt.s32.totalorder %s18, 2
      // Predicated region
      $region29: #{tpu_custom_call.1} parent=5 // pred_check
        %p204 = pneg %p203
      $region30: #{tpu_custom_call.1} parent=5 // pred_check_branch
        %206 = sbr.rel (%p204) target = $region32
      $region31: #{tpu_custom_call.1} parent=5 // pred_region
        // Predicated region
        $region33: #{tpu_custom_call.1} parent=31 // pred_check
          %p207 = pneg %p38
        $region34: #{tpu_custom_call.1} parent=31 // pred_check_branch
          %209 = sbr.rel (%p207) target = $region36
        $region35: #{tpu_custom_call.1} parent=31 // pred_region
          %s210 = sand.u32 %s28, 1
          %s211 = scalar_lea.sflag [#allocation4], %s210
          %s212 = sand.u32 %s28, 1
          %s213 = smul.addr %s212, 32
          %s214 = scalar_lea.vmem [#allocation3], %s213
          %s215 = smul.u32 4, %s18
          %217 = vsyncadd %s211, 0
          %s218 = smul.addr %s215, 8
          %s219 = scalar_lea.hbm %s0, %s218
          %s220 = sshll.u32 %s219, 4
          %s221 = int_to_ptr.hbm [resolvable:$true] %s220
          %s222 = sshll.u32 %s214, 4
          %s223 = int_to_ptr.vmem [resolvable:$true] %s222
          %228 = dma.hbm_to_vmem [thread:$0]  %s221, 512, %s223, %s211, 128, 128, 8
        $region36: #{tpu_custom_call.1} parent=31 // pred_fallthru
          _
      $region32: #{tpu_custom_call.1} parent=5 // pred_fallthru
        _
      %p229 = scmp.le.s32.totalorder 1, %s18
      %p230 = scmp.lt.s32.totalorder %s18, 3
      %p231 = pnand %p229, %p230
      %p232 = pneg %p231
      // Predicated region
      $region37: #{tpu_custom_call.1} parent=5 // pred_check
        _
      $region38: #{tpu_custom_call.1} parent=5 // pred_check_branch
        %234 = sbr.rel (%p231) target = $region40
      $region39: #{tpu_custom_call.1} parent=5 // pred_region
        %s235 = ssub.s32 %s18, 1
        %s236 = sand.u32 %s31, 1
        %s237 = scalar_lea.sflag [#allocation4], %s236
        %s238 = sand.u32 %s31, 1
        %s239 = smul.addr %s238, 32
        %s240 = scalar_lea.vmem [#allocation3], %s239
        // Predicated region
        $region41: #{tpu_custom_call.1} parent=39 // pred_check
          %p241 = pneg %p44
        $region42: #{tpu_custom_call.1} parent=39 // pred_check_branch
          %243 = sbr.rel (%p241) target = $region44
        $region43: #{tpu_custom_call.1} parent=39 // pred_region
          %245 = dma.done %s237, 512
        $region44: #{tpu_custom_call.1} parent=39 // pred_fallthru
          _
        // Predicated region
        $region45: #{tpu_custom_call.1} parent=39 // pred_check
          %p246 = pneg %p65
        $region46: #{tpu_custom_call.1} parent=39 // pred_check_branch
          %248 = sbr.rel (%p246) target = $region48
        $region47: #{tpu_custom_call.1} parent=39 // pred_region
          %250 = dma.done [#allocation7], 768
        $region48: #{tpu_custom_call.1} parent=39 // pred_fallthru
          _
        // Predicated region
        $region49: #{tpu_custom_call.1} parent=39 // pred_check
          %p251 = pneg %p107
        $region50: #{tpu_custom_call.1} parent=39 // pred_check_branch
          %253 = sbr.rel (%p251) target = $region52
        $region51: #{tpu_custom_call.1} parent=39 // pred_region
          %255 = dma.done [#allocation7], 256
        $region52: #{tpu_custom_call.1} parent=39 // pred_fallthru
          _
        %s256 = sand.u32 %s31, 1
        %s257 = scalar_lea.sflag [#allocation4], %s256
        %s258 = sand.u32 %s31, 1
        %s259 = smul.addr %s258, 32
        %s260 = scalar_lea.vmem [#allocation3], %s259
        %p261 = pneg %p44
        %p262 = pneg %p41
        %p263 = pneg %p65
        %p264 = pneg %p62
        %p265 = pneg %p86
        %p266 = pneg %p83
        %p267 = pneg %p107
        %p268 = pneg %p104
        %p269 = pneg %p128
        %p270 = pneg %p125
        %p271 = pneg %p154
        %p272 = pneg %p151
        %s273 = sand.u32 %s141, 1
        %s274 = scalar_lea.sflag [#allocation5], %s273
        %s275 = sand.u32 %s141, 1
        %s276 = smul.addr %s275, 32
        %s277 = scalar_lea.vmem [#allocation9], %s276
        %s278 = smul.u32 4, %s23
        %s279 = smul.u32 4, %s23
        %v281 = vld [vmem:[%s240] sm:$0xff]
        %v282 = vld [vmem:[%s240 + $0x8] sm:$0xff]
        %v283 = vld [vmem:[%s240 + $0x10] sm:$0xff]
        %v284 = vld [vmem:[%s240 + $0x18] sm:$0xff]
        %v285 = vpack.c.bf16 %v282, %v281
        %v286 = vpack.c.bf16 %v284, %v283
        %v287 = vld [vmem:[#allocation6] sm:$0xf]
        %v288 = vld [vmem:[#allocation6 + $0x4] sm:$0xf]
        %v289 = vld [vmem:[#allocation6 + $0x8] sm:$0xf]
        %v290 = vld [vmem:[#allocation6 + $0xc] sm:$0xf]
        %v291 = vld [vmem:[#allocation6 + $0x10] sm:$0xf]
        %v292 = vld [vmem:[#allocation6 + $0x14] sm:$0xf]
        %v293 = vld [vmem:[#allocation6 + $0x18] sm:$0xf]
        %v294 = vld [vmem:[#allocation6 + $0x1c] sm:$0xf]
        %v295 = vld [vmem:[#allocation6 + $0x20] sm:$0xf]
        %v296 = vld [vmem:[#allocation6 + $0x24] sm:$0xf]
        %v297 = vld [vmem:[#allocation6 + $0x28] sm:$0xf]
        %v298 = vld [vmem:[#allocation6 + $0x2c] sm:$0xf]
        %v299 = vld [vmem:[%s2] sm:$0x1]
        %v301 = vperm.slane %v299, 0
        %v315 = vunpack.c.l.b16 %v287
        %v316 = vunpack.c.l.b16 %v288
        %v317 = vunpack.c.l.b16 %v289
        %v318 = vunpack.c.l.b16 %v290
        %v319 = vunpack.c.l.b16 %v291
        %v320 = vunpack.c.l.b16 %v292
        %v321 = vunpack.c.l.b16 %v293
        %v322 = vunpack.c.l.b16 %v294
        %v323 = vunpack.c.l.b16 %v295
        %v324 = vunpack.c.l.b16 %v296
        %v325 = vunpack.c.l.b16 %v297
        %v326 = vunpack.c.l.b16 %v298
        %v327 = vpack.c.b16 %v316, %v315
        %v328 = vpack.c.b16 %v318, %v317
        %v329 = vpack.c.b16 %v320, %v319
        %v330 = vpack.c.b16 %v322, %v321
        %v331 = vpack.c.b16 %v324, %v323
        %v332 = vpack.c.b16 %v326, %v325
        %vm339 = vcmask 785408
        %v341 = vsel %vm339, %v285, 0
        %v344 = vsel %vm339, %v286, 0
        %346 = vmatpush.bf16.msra.mxu0 0
        %347 = vmatpush.bf16.msra.mxu0 0
        %348 = vmatpush.bf16.msra.mxu0 %v332
        %349 = vmatpush.bf16.msra.mxu0 %v331
        %350 = vmatpush.bf16.msra.mxu0 %v330
        %351 = vmatpush.bf16.msra.mxu0 %v329
        %352 = vmatpush.bf16.msra.mxu0 %v328
        %353 = vmatpush.bf16.msra.mxu0 %v327
        %354 = vmatmul.bf16.gmra.mxu0 %v341
        %v355 = vpop.f32.mrf.mxu0
        %v356 = vadd.f32 %v301, %v355
        %v357 = vpop.f32.mrf.mxu0
        %v358 = vadd.f32 %v301, %v357
        %359 = vmatmul.bf16.gmra.mxu0 %v344
        %v360 = vpop.f32.mrf.mxu0
        %v361 = vadd.f32 %v301, %v360
        %v362 = vpop.f32.mrf.mxu0
        %v363 = vadd.f32 %v301, %v362
        %364 = vdwg.mxu0
        %366 = vrot.lane.b32.xlu0 %v356, 64
        %v367 = vpop.permute.xlu0 %366
        %vm368 = vcmask 64512
        %v369 = vsel %vm368, %v367, 0
        %v371 = vsel %vm368, %v356, 0
        %373 = vmatpush.xpose.msra.mxu0 0.0
        %374 = vmatpush.xpose.msra.mxu0 0.0
        %375 = vmatpush.xpose.msra.mxu0 0.0
        %376 = vmatpush.xpose.msra.mxu0 0.0
        %377 = vmatpush.xpose.msra.mxu0 0.0
        %378 = vmatpush.xpose.msra.mxu0 0.0
        %379 = vmatpush.xpose.msra.mxu0 0.0
        %380 = vmatpush.xpose.msra.mxu0 0.0
        %381 = vmatpush.xpose.msra.mxu0 0.0
        %382 = vmatpush.xpose.msra.mxu0 0.0
        %383 = vmatpush.xpose.msra.mxu0 0.0
        %384 = vmatpush.xpose.msra.mxu0 0.0
        %385 = vmatpush.xpose.msra.mxu0 0.0
        %386 = vmatpush.xpose.msra.mxu0 0.0
        %387 = vmatpush.xpose.msra.mxu0 0.0
        %388 = vmatpush.xpose.msra.mxu0 %v371
        %389 = vmatmul.f32.gmra.mxu0 %v369
        %v390 = vpop.f32.mrf.mxu0
        %v391 = vadd.f32 0.0, %v390
        %392 = vdwg.mxu0
        %394 = vrot.lane.b32.xlu0 %v358, 64
        %v395 = vpop.permute.xlu0 %394
        %v396 = vsel %vm368, %v395, 0
        %v398 = vsel %vm368, %v358, 0
        %400 = vmatpush.xpose.msra.mxu0 0.0
        %401 = vmatpush.xpose.msra.mxu0 0.0
        %402 = vmatpush.xpose.msra.mxu0 0.0
        %403 = vmatpush.xpose.msra.mxu0 0.0
        %404 = vmatpush.xpose.msra.mxu0 0.0
        %405 = vmatpush.xpose.msra.mxu0 0.0
        %406 = vmatpush.xpose.msra.mxu0 0.0
        %407 = vmatpush.xpose.msra.mxu0 0.0
        %408 = vmatpush.xpose.msra.mxu0 0.0
        %409 = vmatpush.xpose.msra.mxu0 0.0
        %410 = vmatpush.xpose.msra.mxu0 0.0
        %411 = vmatpush.xpose.msra.mxu0 0.0
        %412 = vmatpush.xpose.msra.mxu0 0.0
        %413 = vmatpush.xpose.msra.mxu0 0.0
        %414 = vmatpush.xpose.msra.mxu0 0.0
        %415 = vmatpush.xpose.msra.mxu0 %v398
        %416 = vmatmul.f32.gmra.mxu0 %v396
        %v417 = vpop.f32.mrf.mxu0
        %v418 = vadd.f32 0.0, %v417
        %419 = vdwg.mxu0
        %421 = vrot.lane.b32.xlu0 %v361, 64
        %v422 = vpop.permute.xlu0 %421
        %v423 = vsel %vm368, %v422, 0
        %v425 = vsel %vm368, %v361, 0
        %427 = vmatpush.xpose.msra.mxu0 0.0
        %428 = vmatpush.xpose.msra.mxu0 0.0
        %429 = vmatpush.xpose.msra.mxu0 0.0
        %430 = vmatpush.xpose.msra.mxu0 0.0
        %431 = vmatpush.xpose.msra.mxu0 0.0
        %432 = vmatpush.xpose.msra.mxu0 0.0
        %433 = vmatpush.xpose.msra.mxu0 0.0
        %434 = vmatpush.xpose.msra.mxu0 0.0
        %435 = vmatpush.xpose.msra.mxu0 0.0
        %436 = vmatpush.xpose.msra.mxu0 0.0
        %437 = vmatpush.xpose.msra.mxu0 0.0
        %438 = vmatpush.xpose.msra.mxu0 0.0
        %439 = vmatpush.xpose.msra.mxu0 0.0
        %440 = vmatpush.xpose.msra.mxu0 0.0
        %441 = vmatpush.xpose.msra.mxu0 0.0
        %442 = vmatpush.xpose.msra.mxu0 %v425
        %443 = vmatmul.f32.gmra.mxu0 %v423
        %v444 = vpop.f32.mrf.mxu0
        %v445 = vadd.f32 0.0, %v444
        %446 = vdwg.mxu0
        %448 = vrot.lane.b32.xlu0 %v363, 64
        %v449 = vpop.permute.xlu0 %448
        %v450 = vsel %vm368, %v449, 0
        %v452 = vsel %vm368, %v363, 0
        %454 = vmatpush.xpose.msra.mxu0 0.0
        %455 = vmatpush.xpose.msra.mxu0 0.0
        %456 = vmatpush.xpose.msra.mxu0 0.0
        %457 = vmatpush.xpose.msra.mxu0 0.0
        %458 = vmatpush.xpose.msra.mxu0 0.0
        %459 = vmatpush.xpose.msra.mxu0 0.0
        %460 = vmatpush.xpose.msra.mxu0 0.0
        %461 = vmatpush.xpose.msra.mxu0 0.0
        %462 = vmatpush.xpose.msra.mxu0 0.0
        %463 = vmatpush.xpose.msra.mxu0 0.0
        %464 = vmatpush.xpose.msra.mxu0 0.0
        %465 = vmatpush.xpose.msra.mxu0 0.0
        %466 = vmatpush.xpose.msra.mxu0 0.0
        %467 = vmatpush.xpose.msra.mxu0 0.0
        %468 = vmatpush.xpose.msra.mxu0 0.0
        %469 = vmatpush.xpose.msra.mxu0 %v452
        %470 = vmatmul.f32.gmra.mxu0 %v450
        %v471 = vpop.f32.mrf.mxu0
        %v472 = vadd.f32 0.0, %v471
        %473 = vdwg.mxu0
        %v474 = vsel %vm368, %v391, -inf
        %475 = vmax.xlane.f32.xlu0 %v474
        %v476 = vpop.xlane.xlu0 %475
        %v477 = vsel %vm368, %v418, -inf
        %478 = vmax.xlane.f32.xlu0 %v477
        %v479 = vpop.xlane.xlu0 %478
        %v480 = vsel %vm368, %v445, -inf
        %481 = vmax.xlane.f32.xlu0 %v480
        %v482 = vpop.xlane.xlu0 %481
        %v483 = vsel %vm368, %v472, -inf
        %484 = vmax.xlane.f32.xlu0 %v483
        %v485 = vpop.xlane.xlu0 %484
        %v486 = vsub.f32 %v391, %v476
        %v487 = vsub.f32 %v418, %v479
        %v488 = vsub.f32 %v445, %v482
        %v489 = vsub.f32 %v472, %v485
        %v490 = vmul.f32 %v486, 1.442695
        %v491 = vpow.pop %v490
        %v492 = vmul.f32 %v487, 1.442695
        %v493 = vpow.pop %v492
        %v494 = vmul.f32 %v488, 1.442695
        %v495 = vpow.pop %v494
        %v496 = vmul.f32 %v489, 1.442695
        %v497 = vpow.pop %v496
        %v498 = vsel %vm368, %v491, 0.0
        %499 = vadd.xlane.f32.xlu0 %v498
        %v500 = vpop.xlane.xlu0 %499
        %v501 = vsel %vm368, %v493, 0.0
        %502 = vadd.xlane.f32.xlu0 %v501
        %v503 = vpop.xlane.xlu0 %502
        %v504 = vsel %vm368, %v495, 0.0
        %505 = vadd.xlane.f32.xlu0 %v504
        %v506 = vpop.xlane.xlu0 %505
        %v507 = vsel %vm368, %v497, 0.0
        %508 = vadd.xlane.f32.xlu0 %v507
        %v509 = vpop.xlane.xlu0 %508
        %v510 = vrcp.pop %v500
        %v511 = vrcp.pop %v503
        %v512 = vrcp.pop %v506
        %v513 = vrcp.pop %v509
        %v514 = vmul.f32 %v491, %v510
        %v515 = vmul.f32 %v493, %v511
        %v516 = vmul.f32 %v495, %v512
        %v517 = vmul.f32 %v497, %v513
        %518 = vrot.lane.b32.xlu0 %v356, 96
        %v519 = vpop.permute.xlu0 %518
        %v522 = vsel %vm368, %v514, 0
        %524 = vmatpush.msra.mxu0 0.0
        %525 = vmatpush.msra.mxu0 0.0
        %526 = vmatpush.msra.mxu0 0.0
        %527 = vmatpush.msra.mxu0 0.0
        %528 = vmatpush.msra.mxu0 0.0
        %529 = vmatpush.msra.mxu0 0.0
        %530 = vmatpush.msra.mxu0 0.0
        %531 = vmatpush.msra.mxu0 0.0
        %532 = vmatpush.msra.mxu0 0.0
        %533 = vmatpush.msra.mxu0 0.0
        %534 = vmatpush.msra.mxu0 0.0
        %535 = vmatpush.msra.mxu0 0.0
        %536 = vmatpush.msra.mxu0 0.0
        %537 = vmatpush.msra.mxu0 0.0
        %538 = vmatpush.msra.mxu0 0.0
        %539 = vmatpush.msra.mxu0 %v519
        %540 = vmatmul.f32.gmra.mxu0 %v522
        %v541 = vpop.f32.mrf.mxu0
        %v542 = vadd.f32 0.0, %v541
        %543 = vdwg.mxu0
        %544 = vrot.lane.b32.xlu0 %v358, 96
        %v545 = vpop.permute.xlu0 %544
        %v548 = vsel %vm368, %v515, 0
        %550 = vmatpush.msra.mxu0 0.0
        %551 = vmatpush.msra.mxu0 0.0
        %552 = vmatpush.msra.mxu0 0.0
        %553 = vmatpush.msra.mxu0 0.0
        %554 = vmatpush.msra.mxu0 0.0
        %555 = vmatpush.msra.mxu0 0.0
        %556 = vmatpush.msra.mxu0 0.0
        %557 = vmatpush.msra.mxu0 0.0
        %558 = vmatpush.msra.mxu0 0.0
        %559 = vmatpush.msra.mxu0 0.0
        %560 = vmatpush.msra.mxu0 0.0
        %561 = vmatpush.msra.mxu0 0.0
        %562 = vmatpush.msra.mxu0 0.0
        %563 = vmatpush.msra.mxu0 0.0
        %564 = vmatpush.msra.mxu0 0.0
        %565 = vmatpush.msra.mxu0 %v545
        %566 = vmatmul.f32.gmra.mxu0 %v548
        %v567 = vpop.f32.mrf.mxu0
        %v568 = vadd.f32 0.0, %v567
        %569 = vdwg.mxu0
        %570 = vrot.lane.b32.xlu0 %v361, 96
        %v571 = vpop.permute.xlu0 %570
        %v574 = vsel %vm368, %v516, 0
        %576 = vmatpush.msra.mxu0 0.0
        %577 = vmatpush.msra.mxu0 0.0
        %578 = vmatpush.msra.mxu0 0.0
        %579 = vmatpush.msra.mxu0 0.0
        %580 = vmatpush.msra.mxu0 0.0
        %581 = vmatpush.msra.mxu0 0.0
        %582 = vmatpush.msra.mxu0 0.0
        %583 = vmatpush.msra.mxu0 0.0
        %584 = vmatpush.msra.mxu0 0.0
        %585 = vmatpush.msra.mxu0 0.0
        %586 = vmatpush.msra.mxu0 0.0
        %587 = vmatpush.msra.mxu0 0.0
        %588 = vmatpush.msra.mxu0 0.0
        %589 = vmatpush.msra.mxu0 0.0
        %590 = vmatpush.msra.mxu0 0.0
        %591 = vmatpush.msra.mxu0 %v571
        %592 = vmatmul.f32.gmra.mxu0 %v574
        %v593 = vpop.f32.mrf.mxu0
        %v594 = vadd.f32 0.0, %v593
        %595 = vdwg.mxu0
        %596 = vrot.lane.b32.xlu0 %v363, 96
        %v597 = vpop.permute.xlu0 %596
        %v600 = vsel %vm368, %v517, 0
        %602 = vmatpush.msra.mxu0 0.0
        %603 = vmatpush.msra.mxu0 0.0
        %604 = vmatpush.msra.mxu0 0.0
        %605 = vmatpush.msra.mxu0 0.0
        %606 = vmatpush.msra.mxu0 0.0
        %607 = vmatpush.msra.mxu0 0.0
        %608 = vmatpush.msra.mxu0 0.0
        %609 = vmatpush.msra.mxu0 0.0
        %610 = vmatpush.msra.mxu0 0.0
        %611 = vmatpush.msra.mxu0 0.0
        %612 = vmatpush.msra.mxu0 0.0
        %613 = vmatpush.msra.mxu0 0.0
        %614 = vmatpush.msra.mxu0 0.0
        %615 = vmatpush.msra.mxu0 0.0
        %616 = vmatpush.msra.mxu0 0.0
        %617 = vmatpush.msra.mxu0 %v597
        %618 = vmatmul.f32.gmra.mxu0 %v600
        %v619 = vpop.f32.mrf.mxu0
        %v620 = vadd.f32 0.0, %v619
        %621 = vdwg.mxu0
        %622 = vst.msk [vmem:[#allocation2] sm:$0xff] %vm368, %v542
        %623 = vst.msk [vmem:[#allocation2 + $0x8] sm:$0xff] %vm368, %v568
        %624 = vst.msk [vmem:[#allocation2 + $0x10] sm:$0xff] %vm368, %v594
        %625 = vst.msk [vmem:[#allocation2 + $0x18] sm:$0xff] %vm368, %v620
        %626 = vrot.lane.b32.xlu0 %v356, 56
        %v627 = vpop.permute.xlu0 %626
        %628 = vrot.lane.b32.xlu0 %v356, 120
        %v629 = vpop.permute.xlu0 %628
        %v630 = vsel %vm368, %v627, 0
        %v632 = vsel %vm368, %v629, 0
        %634 = vmatpush.xpose.msra.mxu0 0.0
        %635 = vmatpush.xpose.msra.mxu0 0.0
        %636 = vmatpush.xpose.msra.mxu0 0.0
        %637 = vmatpush.xpose.msra.mxu0 0.0
        %638 = vmatpush.xpose.msra.mxu0 0.0
        %639 = vmatpush.xpose.msra.mxu0 0.0
        %640 = vmatpush.xpose.msra.mxu0 0.0
        %641 = vmatpush.xpose.msra.mxu0 0.0
        %642 = vmatpush.xpose.msra.mxu0 0.0
        %643 = vmatpush.xpose.msra.mxu0 0.0
        %644 = vmatpush.xpose.msra.mxu0 0.0
        %645 = vmatpush.xpose.msra.mxu0 0.0
        %646 = vmatpush.xpose.msra.mxu0 0.0
        %647 = vmatpush.xpose.msra.mxu0 0.0
        %648 = vmatpush.xpose.msra.mxu0 0.0
        %649 = vmatpush.xpose.msra.mxu0 %v632
        %650 = vmatmul.f32.gmra.mxu0 %v630
        %v651 = vpop.f32.mrf.mxu0
        %v652 = vadd.f32 0.0, %v651
        %653 = vdwg.mxu0
        %654 = vrot.lane.b32.xlu0 %v358, 56
        %v655 = vpop.permute.xlu0 %654
        %656 = vrot.lane.b32.xlu0 %v358, 120
        %v657 = vpop.permute.xlu0 %656
        %v658 = vsel %vm368, %v655, 0
        %v660 = vsel %vm368, %v657, 0
        %662 = vmatpush.xpose.msra.mxu0 0.0
        %663 = vmatpush.xpose.msra.mxu0 0.0
        %664 = vmatpush.xpose.msra.mxu0 0.0
        %665 = vmatpush.xpose.msra.mxu0 0.0
        %666 = vmatpush.xpose.msra.mxu0 0.0
        %667 = vmatpush.xpose.msra.mxu0 0.0
        %668 = vmatpush.xpose.msra.mxu0 0.0
        %669 = vmatpush.xpose.msra.mxu0 0.0
        %670 = vmatpush.xpose.msra.mxu0 0.0
        %671 = vmatpush.xpose.msra.mxu0 0.0
        %672 = vmatpush.xpose.msra.mxu0 0.0
        %673 = vmatpush.xpose.msra.mxu0 0.0
        %674 = vmatpush.xpose.msra.mxu0 0.0
        %675 = vmatpush.xpose.msra.mxu0 0.0
        %676 = vmatpush.xpose.msra.mxu0 0.0
        %677 = vmatpush.xpose.msra.mxu0 %v660
        %678 = vmatmul.f32.gmra.mxu0 %v658
        %v679 = vpop.f32.mrf.mxu0
        %v680 = vadd.f32 0.0, %v679
        %681 = vdwg.mxu0
        %682 = vrot.lane.b32.xlu0 %v361, 56
        %v683 = vpop.permute.xlu0 %682
        %684 = vrot.lane.b32.xlu0 %v361, 120
        %v685 = vpop.permute.xlu0 %684
        %v686 = vsel %vm368, %v683, 0
        %v688 = vsel %vm368, %v685, 0
        %690 = vmatpush.xpose.msra.mxu0 0.0
        %691 = vmatpush.xpose.msra.mxu0 0.0
        %692 = vmatpush.xpose.msra.mxu0 0.0
        %693 = vmatpush.xpose.msra.mxu0 0.0
        %694 = vmatpush.xpose.msra.mxu0 0.0
        %695 = vmatpush.xpose.msra.mxu0 0.0
        %696 = vmatpush.xpose.msra.mxu0 0.0
        %697 = vmatpush.xpose.msra.mxu0 0.0
        %698 = vmatpush.xpose.msra.mxu0 0.0
        %699 = vmatpush.xpose.msra.mxu0 0.0
        %700 = vmatpush.xpose.msra.mxu0 0.0
        %701 = vmatpush.xpose.msra.mxu0 0.0
        %702 = vmatpush.xpose.msra.mxu0 0.0
        %703 = vmatpush.xpose.msra.mxu0 0.0
        %704 = vmatpush.xpose.msra.mxu0 0.0
        %705 = vmatpush.xpose.msra.mxu0 %v688
        %706 = vmatmul.f32.gmra.mxu0 %v686
        %v707 = vpop.f32.mrf.mxu0
        %v708 = vadd.f32 0.0, %v707
        %709 = vdwg.mxu0
        %710 = vrot.lane.b32.xlu0 %v363, 56
        %v711 = vpop.permute.xlu0 %710
        %712 = vrot.lane.b32.xlu0 %v363, 120
        %v713 = vpop.permute.xlu0 %712
        %v714 = vsel %vm368, %v711, 0
        %v716 = vsel %vm368, %v713, 0
        %718 = vmatpush.xpose.msra.mxu0 0.0
        %719 = vmatpush.xpose.msra.mxu0 0.0
        %720 = vmatpush.xpose.msra.mxu0 0.0
        %721 = vmatpush.xpose.msra.mxu0 0.0
        %722 = vmatpush.xpose.msra.mxu0 0.0
        %723 = vmatpush.xpose.msra.mxu0 0.0
        %724 = vmatpush.xpose.msra.mxu0 0.0
        %725 = vmatpush.xpose.msra.mxu0 0.0
        %726 = vmatpush.xpose.msra.mxu0 0.0
        %727 = vmatpush.xpose.msra.mxu0 0.0
        %728 = vmatpush.xpose.msra.mxu0 0.0
        %729 = vmatpush.xpose.msra.mxu0 0.0
        %730 = vmatpush.xpose.msra.mxu0 0.0
        %731 = vmatpush.xpose.msra.mxu0 0.0
        %732 = vmatpush.xpose.msra.mxu0 0.0
        %733 = vmatpush.xpose.msra.mxu0 %v716
        %734 = vmatmul.f32.gmra.mxu0 %v714
        %v735 = vpop.f32.mrf.mxu0
        %v736 = vadd.f32 0.0, %v735
        %737 = vdwg.mxu0
        %v738 = vsel %vm368, %v652, -inf
        %739 = vmax.xlane.f32.xlu0 %v738
        %v740 = vpop.xlane.xlu0 %739
        %v741 = vsel %vm368, %v680, -inf
        %742 = vmax.xlane.f32.xlu0 %v741
        %v743 = vpop.xlane.xlu0 %742
        %v744 = vsel %vm368, %v708, -inf
        %745 = vmax.xlane.f32.xlu0 %v744
        %v746 = vpop.xlane.xlu0 %745
        %v747 = vsel %vm368, %v736, -inf
        %748 = vmax.xlane.f32.xlu0 %v747
        %v749 = vpop.xlane.xlu0 %748
        %v750 = vsub.f32 %v652, %v740
        %v751 = vsub.f32 %v680, %v743
        %v752 = vsub.f32 %v708, %v746
        %v753 = vsub.f32 %v736, %v749
        %v754 = vmul.f32 %v750, 1.442695
        %v755 = vpow.pop %v754
        %v756 = vmul.f32 %v751, 1.442695
        %v757 = vpow.pop %v756
        %v758 = vmul.f32 %v752, 1.442695
        %v759 = vpow.pop %v758
        %v760 = vmul.f32 %v753, 1.442695
        %v761 = vpow.pop %v760
        %v762 = vsel %vm368, %v755, 0.0
        %763 = vadd.xlane.f32.xlu0 %v762
        %v764 = vpop.xlane.xlu0 %763
        %v765 = vsel %vm368, %v757, 0.0
        %766 = vadd.xlane.f32.xlu0 %v765
        %v767 = vpop.xlane.xlu0 %766
        %v768 = vsel %vm368, %v759, 0.0
        %769 = vadd.xlane.f32.xlu0 %v768
        %v770 = vpop.xlane.xlu0 %769
        %v771 = vsel %vm368, %v761, 0.0
        %772 = vadd.xlane.f32.xlu0 %v771
        %v773 = vpop.xlane.xlu0 %772
        %v774 = vrcp.pop %v764
        %v775 = vrcp.pop %v767
        %v776 = vrcp.pop %v770
        %v777 = vrcp.pop %v773
        %v778 = vmul.f32 %v755, %v774
        %v779 = vmul.f32 %v757, %v775
        %v780 = vmul.f32 %v759, %v776
        %v781 = vmul.f32 %v761, %v777
        %782 = vrot.lane.b32.xlu0 %v356, 88
        %v783 = vpop.permute.xlu0 %782
        %v786 = vsel %vm368, %v778, 0
        %788 = vmatpush.msra.mxu0 0.0
        %789 = vmatpush.msra.mxu0 0.0
        %790 = vmatpush.msra.mxu0 0.0
        %791 = vmatpush.msra.mxu0 0.0
        %792 = vmatpush.msra.mxu0 0.0
        %793 = vmatpush.msra.mxu0 0.0
        %794 = vmatpush.msra.mxu0 0.0
        %795 = vmatpush.msra.mxu0 0.0
        %796 = vmatpush.msra.mxu0 0.0
        %797 = vmatpush.msra.mxu0 0.0
        %798 = vmatpush.msra.mxu0 0.0
        %799 = vmatpush.msra.mxu0 0.0
        %800 = vmatpush.msra.mxu0 0.0
        %801 = vmatpush.msra.mxu0 0.0
        %802 = vmatpush.msra.mxu0 0.0
        %803 = vmatpush.msra.mxu0 %v783
        %804 = vmatmul.f32.gmra.mxu0 %v786
        %v805 = vpop.f32.mrf.mxu0
        %v806 = vadd.f32 0.0, %v805
        %807 = vdwg.mxu0
        %808 = vrot.lane.b32.xlu0 %v358, 88
        %v809 = vpop.permute.xlu0 %808
        %v812 = vsel %vm368, %v779, 0
        %814 = vmatpush.msra.mxu0 0.0
        %815 = vmatpush.msra.mxu0 0.0
        %816 = vmatpush.msra.mxu0 0.0
        %817 = vmatpush.msra.mxu0 0.0
        %818 = vmatpush.msra.mxu0 0.0
        %819 = vmatpush.msra.mxu0 0.0
        %820 = vmatpush.msra.mxu0 0.0
        %821 = vmatpush.msra.mxu0 0.0
        %822 = vmatpush.msra.mxu0 0.0
        %823 = vmatpush.msra.mxu0 0.0
        %824 = vmatpush.msra.mxu0 0.0
        %825 = vmatpush.msra.mxu0 0.0
        %826 = vmatpush.msra.mxu0 0.0
        %827 = vmatpush.msra.mxu0 0.0
        %828 = vmatpush.msra.mxu0 0.0
        %829 = vmatpush.msra.mxu0 %v809
        %830 = vmatmul.f32.gmra.mxu0 %v812
        %v831 = vpop.f32.mrf.mxu0
        %v832 = vadd.f32 0.0, %v831
        %833 = vdwg.mxu0
        %834 = vrot.lane.b32.xlu0 %v361, 88
        %v835 = vpop.permute.xlu0 %834
        %v838 = vsel %vm368, %v780, 0
        %840 = vmatpush.msra.mxu0 0.0
        %841 = vmatpush.msra.mxu0 0.0
        %842 = vmatpush.msra.mxu0 0.0
        %843 = vmatpush.msra.mxu0 0.0
        %844 = vmatpush.msra.mxu0 0.0
        %845 = vmatpush.msra.mxu0 0.0
        %846 = vmatpush.msra.mxu0 0.0
        %847 = vmatpush.msra.mxu0 0.0
        %848 = vmatpush.msra.mxu0 0.0
        %849 = vmatpush.msra.mxu0 0.0
        %850 = vmatpush.msra.mxu0 0.0
        %851 = vmatpush.msra.mxu0 0.0
        %852 = vmatpush.msra.mxu0 0.0
        %853 = vmatpush.msra.mxu0 0.0
        %854 = vmatpush.msra.mxu0 0.0
        %855 = vmatpush.msra.mxu0 %v835
        %856 = vmatmul.f32.gmra.mxu0 %v838
        %v857 = vpop.f32.mrf.mxu0
        %v858 = vadd.f32 0.0, %v857
        %859 = vdwg.mxu0
        %860 = vrot.lane.b32.xlu0 %v363, 88
        %v861 = vpop.permute.xlu0 %860
        %v864 = vsel %vm368, %v781, 0
        %866 = vmatpush.msra.mxu0 0.0
        %867 = vmatpush.msra.mxu0 0.0
        %868 = vmatpush.msra.mxu0 0.0
        %869 = vmatpush.msra.mxu0 0.0
        %870 = vmatpush.msra.mxu0 0.0
        %871 = vmatpush.msra.mxu0 0.0
        %872 = vmatpush.msra.mxu0 0.0
        %873 = vmatpush.msra.mxu0 0.0
        %874 = vmatpush.msra.mxu0 0.0
        %875 = vmatpush.msra.mxu0 0.0
        %876 = vmatpush.msra.mxu0 0.0
        %877 = vmatpush.msra.mxu0 0.0
        %878 = vmatpush.msra.mxu0 0.0
        %879 = vmatpush.msra.mxu0 0.0
        %880 = vmatpush.msra.mxu0 0.0
        %881 = vmatpush.msra.mxu0 %v861
        %882 = vmatmul.f32.gmra.mxu0 %v864
        %v883 = vpop.f32.mrf.mxu0
        %v884 = vadd.f32 0.0, %v883
        %885 = vdwg.mxu0
        %890 = vrot.lane.b32.xlu0 %v806, 8
        %v891 = vpop.permute.xlu0 %890
        %892 = vrot.lane.b32.xlu0 %v832, 8
        %v893 = vpop.permute.xlu0 %892
        %894 = vrot.lane.b32.xlu0 %v858, 8
        %v895 = vpop.permute.xlu0 %894
        %896 = vrot.lane.b32.xlu0 %v884, 8
        %v897 = vpop.permute.xlu0 %896
        %vm902 = vcmask 130112
        %903 = vst.msk [vmem:[#allocation2] sm:$0xff] %vm902, %v891
        %904 = vst.msk [vmem:[#allocation2 + $0x8] sm:$0xff] %vm902, %v893
        %905 = vst.msk [vmem:[#allocation2 + $0x10] sm:$0xff] %vm902, %v895
        %906 = vst.msk [vmem:[#allocation2 + $0x18] sm:$0xff] %vm902, %v897
        %907 = vrot.lane.b32.xlu0 %v356, 48
        %v908 = vpop.permute.xlu0 %907
        %909 = vrot.lane.b32.xlu0 %v356, 112
        %v910 = vpop.permute.xlu0 %909
        %v911 = vsel %vm368, %v908, 0
        %v913 = vsel %vm368, %v910, 0
        %915 = vmatpush.xpose.msra.mxu0 0.0
        %916 = vmatpush.xpose.msra.mxu0 0.0
        %917 = vmatpush.xpose.msra.mxu0 0.0
        %918 = vmatpush.xpose.msra.mxu0 0.0
        %919 = vmatpush.xpose.msra.mxu0 0.0
        %920 = vmatpush.xpose.msra.mxu0 0.0
        %921 = vmatpush.xpose.msra.mxu0 0.0
        %922 = vmatpush.xpose.msra.mxu0 0.0
        %923 = vmatpush.xpose.msra.mxu0 0.0
        %924 = vmatpush.xpose.msra.mxu0 0.0
        %925 = vmatpush.xpose.msra.mxu0 0.0
        %926 = vmatpush.xpose.msra.mxu0 0.0
        %927 = vmatpush.xpose.msra.mxu0 0.0
        %928 = vmatpush.xpose.msra.mxu0 0.0
        %929 = vmatpush.xpose.msra.mxu0 0.0
        %930 = vmatpush.xpose.msra.mxu0 %v913
        %931 = vmatmul.f32.gmra.mxu0 %v911
        %v932 = vpop.f32.mrf.mxu0
        %v933 = vadd.f32 0.0, %v932
        %934 = vdwg.mxu0
        %935 = vrot.lane.b32.xlu0 %v358, 48
        %v936 = vpop.permute.xlu0 %935
        %937 = vrot.lane.b32.xlu0 %v358, 112
        %v938 = vpop.permute.xlu0 %937
        %v939 = vsel %vm368, %v936, 0
        %v941 = vsel %vm368, %v938, 0
        %943 = vmatpush.xpose.msra.mxu0 0.0
        %944 = vmatpush.xpose.msra.mxu0 0.0
        %945 = vmatpush.xpose.msra.mxu0 0.0
        %946 = vmatpush.xpose.msra.mxu0 0.0
        %947 = vmatpush.xpose.msra.mxu0 0.0
        %948 = vmatpush.xpose.msra.mxu0 0.0
        %949 = vmatpush.xpose.msra.mxu0 0.0
        %950 = vmatpush.xpose.msra.mxu0 0.0
        %951 = vmatpush.xpose.msra.mxu0 0.0
        %952 = vmatpush.xpose.msra.mxu0 0.0
        %953 = vmatpush.xpose.msra.mxu0 0.0
        %954 = vmatpush.xpose.msra.mxu0 0.0
        %955 = vmatpush.xpose.msra.mxu0 0.0
        %956 = vmatpush.xpose.msra.mxu0 0.0
        %957 = vmatpush.xpose.msra.mxu0 0.0
        %958 = vmatpush.xpose.msra.mxu0 %v941
        %959 = vmatmul.f32.gmra.mxu0 %v939
        %v960 = vpop.f32.mrf.mxu0
        %v961 = vadd.f32 0.0, %v960
        %962 = vdwg.mxu0
        %963 = vrot.lane.b32.xlu0 %v361, 48
        %v964 = vpop.permute.xlu0 %963
        %965 = vrot.lane.b32.xlu0 %v361, 112
        %v966 = vpop.permute.xlu0 %965
        %v967 = vsel %vm368, %v964, 0
        %v969 = vsel %vm368, %v966, 0
        %971 = vmatpush.xpose.msra.mxu0 0.0
        %972 = vmatpush.xpose.msra.mxu0 0.0
        %973 = vmatpush.xpose.msra.mxu0 0.0
        %974 = vmatpush.xpose.msra.mxu0 0.0
        %975 = vmatpush.xpose.msra.mxu0 0.0
        %976 = vmatpush.xpose.msra.mxu0 0.0
        %977 = vmatpush.xpose.msra.mxu0 0.0
        %978 = vmatpush.xpose.msra.mxu0 0.0
        %979 = vmatpush.xpose.msra.mxu0 0.0
        %980 = vmatpush.xpose.msra.mxu0 0.0
        %981 = vmatpush.xpose.msra.mxu0 0.0
        %982 = vmatpush.xpose.msra.mxu0 0.0
        %983 = vmatpush.xpose.msra.mxu0 0.0
        %984 = vmatpush.xpose.msra.mxu0 0.0
        %985 = vmatpush.xpose.msra.mxu0 0.0
        %986 = vmatpush.xpose.msra.mxu0 %v969
        %987 = vmatmul.f32.gmra.mxu0 %v967
        %v988 = vpop.f32.mrf.mxu0
        %v989 = vadd.f32 0.0, %v988
        %990 = vdwg.mxu0
        %991 = vrot.lane.b32.xlu0 %v363, 48
        %v992 = vpop.permute.xlu0 %991
        %993 = vrot.lane.b32.xlu0 %v363, 112
        %v994 = vpop.permute.xlu0 %993
        %v995 = vsel %vm368, %v992, 0
        %v997 = vsel %vm368, %v994, 0
        %999 = vmatpush.xpose.msra.mxu0 0.0
        %1000 = vmatpush.xpose.msra.mxu0 0.0
        %1001 = vmatpush.xpose.msra.mxu0 0.0
        %1002 = vmatpush.xpose.msra.mxu0 0.0
        %1003 = vmatpush.xpose.msra.mxu0 0.0
        %1004 = vmatpush.xpose.msra.mxu0 0.0
        %1005 = vmatpush.xpose.msra.mxu0 0.0
        %1006 = vmatpush.xpose.msra.mxu0 0.0
        %1007 = vmatpush.xpose.msra.mxu0 0.0
        %1008 = vmatpush.xpose.msra.mxu0 0.0
        %1009 = vmatpush.xpose.msra.mxu0 0.0
        %1010 = vmatpush.xpose.msra.mxu0 0.0
        %1011 = vmatpush.xpose.msra.mxu0 0.0
        %1012 = vmatpush.xpose.msra.mxu0 0.0
        %1013 = vmatpush.xpose.msra.mxu0 0.0
        %1014 = vmatpush.xpose.msra.mxu0 %v997
        %1015 = vmatmul.f32.gmra.mxu0 %v995
        %v1016 = vpop.f32.mrf.mxu0
        %v1017 = vadd.f32 0.0, %v1016
        %1018 = vdwg.mxu0
        %v1019 = vsel %vm368, %v933, -inf
        %1020 = vmax.xlane.f32.xlu0 %v1019
        %v1021 = vpop.xlane.xlu0 %1020
        %v1022 = vsel %vm368, %v961, -inf
        %1023 = vmax.xlane.f32.xlu0 %v1022
        %v1024 = vpop.xlane.xlu0 %1023
        %v1025 = vsel %vm368, %v989, -inf
        %1026 = vmax.xlane.f32.xlu0 %v1025
        %v1027 = vpop.xlane.xlu0 %1026
        %v1028 = vsel %vm368, %v1017, -inf
        %1029 = vmax.xlane.f32.xlu0 %v1028
        %v1030 = vpop.xlane.xlu0 %1029
        %v1031 = vsub.f32 %v933, %v1021
        %v1032 = vsub.f32 %v961, %v1024
        %v1033 = vsub.f32 %v989, %v1027
        %v1034 = vsub.f32 %v1017, %v1030
        %v1035 = vmul.f32 %v1031, 1.442695
        %v1036 = vpow.pop %v1035
        %v1037 = vmul.f32 %v1032, 1.442695
        %v1038 = vpow.pop %v1037
        %v1039 = vmul.f32 %v1033, 1.442695
        %v1040 = vpow.pop %v1039
        %v1041 = vmul.f32 %v1034, 1.442695
        %v1042 = vpow.pop %v1041
        %v1043 = vsel %vm368, %v1036, 0.0
        %1044 = vadd.xlane.f32.xlu0 %v1043
        %v1045 = vpop.xlane.xlu0 %1044
        %v1046 = vsel %vm368, %v1038, 0.0
        %1047 = vadd.xlane.f32.xlu0 %v1046
        %v1048 = vpop.xlane.xlu0 %1047
        %v1049 = vsel %vm368, %v1040, 0.0
        %1050 = vadd.xlane.f32.xlu0 %v1049
        %v1051 = vpop.xlane.xlu0 %1050
        %v1052 = vsel %vm368, %v1042, 0.0
        %1053 = vadd.xlane.f32.xlu0 %v1052
        %v1054 = vpop.xlane.xlu0 %1053
        %v1055 = vrcp.pop %v1045
        %v1056 = vrcp.pop %v1048
        %v1057 = vrcp.pop %v1051
        %v1058 = vrcp.pop %v1054
        %v1059 = vmul.f32 %v1036, %v1055
        %v1060 = vmul.f32 %v1038, %v1056
        %v1061 = vmul.f32 %v1040, %v1057
        %v1062 = vmul.f32 %v1042, %v1058
        %1063 = vrot.lane.b32.xlu0 %v356, 80
        %v1064 = vpop.permute.xlu0 %1063
        %v1067 = vsel %vm368, %v1059, 0
        %1069 = vmatpush.msra.mxu0 0.0
        %1070 = vmatpush.msra.mxu0 0.0
        %1071 = vmatpush.msra.mxu0 0.0
        %1072 = vmatpush.msra.mxu0 0.0
        %1073 = vmatpush.msra.mxu0 0.0
        %1074 = vmatpush.msra.mxu0 0.0
        %1075 = vmatpush.msra.mxu0 0.0
        %1076 = vmatpush.msra.mxu0 0.0
        %1077 = vmatpush.msra.mxu0 0.0
        %1078 = vmatpush.msra.mxu0 0.0
        %1079 = vmatpush.msra.mxu0 0.0
        %1080 = vmatpush.msra.mxu0 0.0
        %1081 = vmatpush.msra.mxu0 0.0
        %1082 = vmatpush.msra.mxu0 0.0
        %1083 = vmatpush.msra.mxu0 0.0
        %1084 = vmatpush.msra.mxu0 %v1064
        %1085 = vmatmul.f32.gmra.mxu0 %v1067
        %v1086 = vpop.f32.mrf.mxu0
        %v1087 = vadd.f32 0.0, %v1086
        %1088 = vdwg.mxu0
        %1089 = vrot.lane.b32.xlu0 %v358, 80
        %v1090 = vpop.permute.xlu0 %1089
        %v1093 = vsel %vm368, %v1060, 0
        %1095 = vmatpush.msra.mxu0 0.0
        %1096 = vmatpush.msra.mxu0 0.0
        %1097 = vmatpush.msra.mxu0 0.0
        %1098 = vmatpush.msra.mxu0 0.0
        %1099 = vmatpush.msra.mxu0 0.0
        %1100 = vmatpush.msra.mxu0 0.0
        %1101 = vmatpush.msra.mxu0 0.0
        %1102 = vmatpush.msra.mxu0 0.0
        %1103 = vmatpush.msra.mxu0 0.0
        %1104 = vmatpush.msra.mxu0 0.0
        %1105 = vmatpush.msra.mxu0 0.0
        %1106 = vmatpush.msra.mxu0 0.0
        %1107 = vmatpush.msra.mxu0 0.0
        %1108 = vmatpush.msra.mxu0 0.0
        %1109 = vmatpush.msra.mxu0 0.0
        %1110 = vmatpush.msra.mxu0 %v1090
        %1111 = vmatmul.f32.gmra.mxu0 %v1093
        %v1112 = vpop.f32.mrf.mxu0
        %v1113 = vadd.f32 0.0, %v1112
        %1114 = vdwg.mxu0
        %1115 = vrot.lane.b32.xlu0 %v361, 80
        %v1116 = vpop.permute.xlu0 %1115
        %v1119 = vsel %vm368, %v1061, 0
        %1121 = vmatpush.msra.mxu0 0.0
        %1122 = vmatpush.msra.mxu0 0.0
        %1123 = vmatpush.msra.mxu0 0.0
        %1124 = vmatpush.msra.mxu0 0.0
        %1125 = vmatpush.msra.mxu0 0.0
        %1126 = vmatpush.msra.mxu0 0.0
        %1127 = vmatpush.msra.mxu0 0.0
        %1128 = vmatpush.msra.mxu0 0.0
        %1129 = vmatpush.msra.mxu0 0.0
        %1130 = vmatpush.msra.mxu0 0.0
        %1131 = vmatpush.msra.mxu0 0.0
        %1132 = vmatpush.msra.mxu0 0.0
        %1133 = vmatpush.msra.mxu0 0.0
        %1134 = vmatpush.msra.mxu0 0.0
        %1135 = vmatpush.msra.mxu0 0.0
        %1136 = vmatpush.msra.mxu0 %v1116
        %1137 = vmatmul.f32.gmra.mxu0 %v1119
        %v1138 = vpop.f32.mrf.mxu0
        %v1139 = vadd.f32 0.0, %v1138
        %1140 = vdwg.mxu0
        %1141 = vrot.lane.b32.xlu0 %v363, 80
        %v1142 = vpop.permute.xlu0 %1141
        %v1145 = vsel %vm368, %v1062, 0
        %1147 = vmatpush.msra.mxu0 0.0
        %1148 = vmatpush.msra.mxu0 0.0
        %1149 = vmatpush.msra.mxu0 0.0
        %1150 = vmatpush.msra.mxu0 0.0
        %1151 = vmatpush.msra.mxu0 0.0
        %1152 = vmatpush.msra.mxu0 0.0
        %1153 = vmatpush.msra.mxu0 0.0
        %1154 = vmatpush.msra.mxu0 0.0
        %1155 = vmatpush.msra.mxu0 0.0
        %1156 = vmatpush.msra.mxu0 0.0
        %1157 = vmatpush.msra.mxu0 0.0
        %1158 = vmatpush.msra.mxu0 0.0
        %1159 = vmatpush.msra.mxu0 0.0
        %1160 = vmatpush.msra.mxu0 0.0
        %1161 = vmatpush.msra.mxu0 0.0
        %1162 = vmatpush.msra.mxu0 %v1142
        %1163 = vmatmul.f32.gmra.mxu0 %v1145
        %v1164 = vpop.f32.mrf.mxu0
        %v1165 = vadd.f32 0.0, %v1164
        %1166 = vdwg.mxu0
        %1171 = vrot.lane.b32.xlu0 %v1087, 16
        %v1172 = vpop.permute.xlu0 %1171
        %1173 = vrot.lane.b32.xlu0 %v1113, 16
        %v1174 = vpop.permute.xlu0 %1173
        %1175 = vrot.lane.b32.xlu0 %v1139, 16
        %v1176 = vpop.permute.xlu0 %1175
        %1177 = vrot.lane.b32.xlu0 %v1165, 16
        %v1178 = vpop.permute.xlu0 %1177
        %vm1183 = vcmask 195712
        %1184 = vst.msk [vmem:[#allocation2] sm:$0xff] %vm1183, %v1172
        %1185 = vst.msk [vmem:[#allocation2 + $0x8] sm:$0xff] %vm1183, %v1174
        %1186 = vst.msk [vmem:[#allocation2 + $0x10] sm:$0xff] %vm1183, %v1176
        %1187 = vst.msk [vmem:[#allocation2 + $0x18] sm:$0xff] %vm1183, %v1178
        %1188 = vrot.lane.b32.xlu0 %v356, 40
        %v1189 = vpop.permute.xlu0 %1188
        %1190 = vrot.lane.b32.xlu0 %v356, 104
        %v1191 = vpop.permute.xlu0 %1190
        %v1192 = vsel %vm368, %v1189, 0
        %v1194 = vsel %vm368, %v1191, 0
        %1196 = vmatpush.xpose.msra.mxu0 0.0
        %1197 = vmatpush.xpose.msra.mxu0 0.0
        %1198 = vmatpush.xpose.msra.mxu0 0.0
        %1199 = vmatpush.xpose.msra.mxu0 0.0
        %1200 = vmatpush.xpose.msra.mxu0 0.0
        %1201 = vmatpush.xpose.msra.mxu0 0.0
        %1202 = vmatpush.xpose.msra.mxu0 0.0
        %1203 = vmatpush.xpose.msra.mxu0 0.0
        %1204 = vmatpush.xpose.msra.mxu0 0.0
        %1205 = vmatpush.xpose.msra.mxu0 0.0
        %1206 = vmatpush.xpose.msra.mxu0 0.0
        %1207 = vmatpush.xpose.msra.mxu0 0.0
        %1208 = vmatpush.xpose.msra.mxu0 0.0
        %1209 = vmatpush.xpose.msra.mxu0 0.0
        %1210 = vmatpush.xpose.msra.mxu0 0.0
        %1211 = vmatpush.xpose.msra.mxu0 %v1194
        %1212 = vmatmul.f32.gmra.mxu0 %v1192
        %v1213 = vpop.f32.mrf.mxu0
        %v1214 = vadd.f32 0.0, %v1213
        %1215 = vdwg.mxu0
        %1216 = vrot.lane.b32.xlu0 %v358, 40
        %v1217 = vpop.permute.xlu0 %1216
        %1218 = vrot.lane.b32.xlu0 %v358, 104
        %v1219 = vpop.permute.xlu0 %1218
        %v1220 = vsel %vm368, %v1217, 0
        %v1222 = vsel %vm368, %v1219, 0
        %1224 = vmatpush.xpose.msra.mxu0 0.0
        %1225 = vmatpush.xpose.msra.mxu0 0.0
        %1226 = vmatpush.xpose.msra.mxu0 0.0
        %1227 = vmatpush.xpose.msra.mxu0 0.0
        %1228 = vmatpush.xpose.msra.mxu0 0.0
        %1229 = vmatpush.xpose.msra.mxu0 0.0
        %1230 = vmatpush.xpose.msra.mxu0 0.0
        %1231 = vmatpush.xpose.msra.mxu0 0.0
        %1232 = vmatpush.xpose.msra.mxu0 0.0
        %1233 = vmatpush.xpose.msra.mxu0 0.0
        %1234 = vmatpush.xpose.msra.mxu0 0.0
        %1235 = vmatpush.xpose.msra.mxu0 0.0
        %1236 = vmatpush.xpose.msra.mxu0 0.0
        %1237 = vmatpush.xpose.msra.mxu0 0.0
        %1238 = vmatpush.xpose.msra.mxu0 0.0
        %1239 = vmatpush.xpose.msra.mxu0 %v1222
        %1240 = vmatmul.f32.gmra.mxu0 %v1220
        %v1241 = vpop.f32.mrf.mxu0
        %v1242 = vadd.f32 0.0, %v1241
        %1243 = vdwg.mxu0
        %1244 = vrot.lane.b32.xlu0 %v361, 40
        %v1245 = vpop.permute.xlu0 %1244
        %1246 = vrot.lane.b32.xlu0 %v361, 104
        %v1247 = vpop.permute.xlu0 %1246
        %v1248 = vsel %vm368, %v1245, 0
        %v1250 = vsel %vm368, %v1247, 0
        %1252 = vmatpush.xpose.msra.mxu0 0.0
        %1253 = vmatpush.xpose.msra.mxu0 0.0
        %1254 = vmatpush.xpose.msra.mxu0 0.0
        %1255 = vmatpush.xpose.msra.mxu0 0.0
        %1256 = vmatpush.xpose.msra.mxu0 0.0
        %1257 = vmatpush.xpose.msra.mxu0 0.0
        %1258 = vmatpush.xpose.msra.mxu0 0.0
        %1259 = vmatpush.xpose.msra.mxu0 0.0
        %1260 = vmatpush.xpose.msra.mxu0 0.0
        %1261 = vmatpush.xpose.msra.mxu0 0.0
        %1262 = vmatpush.xpose.msra.mxu0 0.0
        %1263 = vmatpush.xpose.msra.mxu0 0.0
        %1264 = vmatpush.xpose.msra.mxu0 0.0
        %1265 = vmatpush.xpose.msra.mxu0 0.0
        %1266 = vmatpush.xpose.msra.mxu0 0.0
        %1267 = vmatpush.xpose.msra.mxu0 %v1250
        %1268 = vmatmul.f32.gmra.mxu0 %v1248
        %v1269 = vpop.f32.mrf.mxu0
        %v1270 = vadd.f32 0.0, %v1269
        %1271 = vdwg.mxu0
        %1272 = vrot.lane.b32.xlu0 %v363, 40
        %v1273 = vpop.permute.xlu0 %1272
        %1274 = vrot.lane.b32.xlu0 %v363, 104
        %v1275 = vpop.permute.xlu0 %1274
        %v1276 = vsel %vm368, %v1273, 0
        %v1278 = vsel %vm368, %v1275, 0
        %1280 = vmatpush.xpose.msra.mxu0 0.0
        %1281 = vmatpush.xpose.msra.mxu0 0.0
        %1282 = vmatpush.xpose.msra.mxu0 0.0
        %1283 = vmatpush.xpose.msra.mxu0 0.0
        %1284 = vmatpush.xpose.msra.mxu0 0.0
        %1285 = vmatpush.xpose.msra.mxu0 0.0
        %1286 = vmatpush.xpose.msra.mxu0 0.0
        %1287 = vmatpush.xpose.msra.mxu0 0.0
        %1288 = vmatpush.xpose.msra.mxu0 0.0
        %1289 = vmatpush.xpose.msra.mxu0 0.0
        %1290 = vmatpush.xpose.msra.mxu0 0.0
        %1291 = vmatpush.xpose.msra.mxu0 0.0
        %1292 = vmatpush.xpose.msra.mxu0 0.0
        %1293 = vmatpush.xpose.msra.mxu0 0.0
        %1294 = vmatpush.xpose.msra.mxu0 0.0
        %1295 = vmatpush.xpose.msra.mxu0 %v1278
        %1296 = vmatmul.f32.gmra.mxu0 %v1276
        %v1297 = vpop.f32.mrf.mxu0
        %v1298 = vadd.f32 0.0, %v1297
        %1299 = vdwg.mxu0
        %v1300 = vsel %vm368, %v1214, -inf
        %1301 = vmax.xlane.f32.xlu0 %v1300
        %v1302 = vpop.xlane.xlu0 %1301
        %v1303 = vsel %vm368, %v1242, -inf
        %1304 = vmax.xlane.f32.xlu0 %v1303
        %v1305 = vpop.xlane.xlu0 %1304
        %v1306 = vsel %vm368, %v1270, -inf
        %1307 = vmax.xlane.f32.xlu0 %v1306
        %v1308 = vpop.xlane.xlu0 %1307
        %v1309 = vsel %vm368, %v1298, -inf
        %1310 = vmax.xlane.f32.xlu0 %v1309
        %v1311 = vpop.xlane.xlu0 %1310
        %v1312 = vsub.f32 %v1214, %v1302
        %v1313 = vsub.f32 %v1242, %v1305
        %v1314 = vsub.f32 %v1270, %v1308
        %v1315 = vsub.f32 %v1298, %v1311
        %v1316 = vmul.f32 %v1312, 1.442695
        %v1317 = vpow.pop %v1316
        %v1318 = vmul.f32 %v1313, 1.442695
        %v1319 = vpow.pop %v1318
        %v1320 = vmul.f32 %v1314, 1.442695
        %v1321 = vpow.pop %v1320
        %v1322 = vmul.f32 %v1315, 1.442695
        %v1323 = vpow.pop %v1322
        %v1324 = vsel %vm368, %v1317, 0.0
        %1325 = vadd.xlane.f32.xlu0 %v1324
        %v1326 = vpop.xlane.xlu0 %1325
        %v1327 = vsel %vm368, %v1319, 0.0
        %1328 = vadd.xlane.f32.xlu0 %v1327
        %v1329 = vpop.xlane.xlu0 %1328
        %v1330 = vsel %vm368, %v1321, 0.0
        %1331 = vadd.xlane.f32.xlu0 %v1330
        %v1332 = vpop.xlane.xlu0 %1331
        %v1333 = vsel %vm368, %v1323, 0.0
        %1334 = vadd.xlane.f32.xlu0 %v1333
        %v1335 = vpop.xlane.xlu0 %1334
        %v1336 = vrcp.pop %v1326
        %v1337 = vrcp.pop %v1329
        %v1338 = vrcp.pop %v1332
        %v1339 = vrcp.pop %v1335
        %v1340 = vmul.f32 %v1317, %v1336
        %v1341 = vmul.f32 %v1319, %v1337
        %v1342 = vmul.f32 %v1321, %v1338
        %v1343 = vmul.f32 %v1323, %v1339
        %1344 = vrot.lane.b32.xlu0 %v356, 72
        %v1345 = vpop.permute.xlu0 %1344
        %v1348 = vsel %vm368, %v1340, 0
        %1350 = vmatpush.msra.mxu0 0.0
        %1351 = vmatpush.msra.mxu0 0.0
        %1352 = vmatpush.msra.mxu0 0.0
        %1353 = vmatpush.msra.mxu0 0.0
        %1354 = vmatpush.msra.mxu0 0.0
        %1355 = vmatpush.msra.mxu0 0.0
        %1356 = vmatpush.msra.mxu0 0.0
        %1357 = vmatpush.msra.mxu0 0.0
        %1358 = vmatpush.msra.mxu0 0.0
        %1359 = vmatpush.msra.mxu0 0.0
        %1360 = vmatpush.msra.mxu0 0.0
        %1361 = vmatpush.msra.mxu0 0.0
        %1362 = vmatpush.msra.mxu0 0.0
        %1363 = vmatpush.msra.mxu0 0.0
        %1364 = vmatpush.msra.mxu0 0.0
        %1365 = vmatpush.msra.mxu0 %v1345
        %1366 = vmatmul.f32.gmra.mxu0 %v1348
        %v1367 = vpop.f32.mrf.mxu0
        %v1368 = vadd.f32 0.0, %v1367
        %1369 = vdwg.mxu0
        %1370 = vrot.lane.b32.xlu0 %v358, 72
        %v1371 = vpop.permute.xlu0 %1370
        %v1374 = vsel %vm368, %v1341, 0
        %1376 = vmatpush.msra.mxu0 0.0
        %1377 = vmatpush.msra.mxu0 0.0
        %1378 = vmatpush.msra.mxu0 0.0
        %1379 = vmatpush.msra.mxu0 0.0
        %1380 = vmatpush.msra.mxu0 0.0
        %1381 = vmatpush.msra.mxu0 0.0
        %1382 = vmatpush.msra.mxu0 0.0
        %1383 = vmatpush.msra.mxu0 0.0
        %1384 = vmatpush.msra.mxu0 0.0
        %1385 = vmatpush.msra.mxu0 0.0
        %1386 = vmatpush.msra.mxu0 0.0
        %1387 = vmatpush.msra.mxu0 0.0
        %1388 = vmatpush.msra.mxu0 0.0
        %1389 = vmatpush.msra.mxu0 0.0
        %1390 = vmatpush.msra.mxu0 0.0
        %1391 = vmatpush.msra.mxu0 %v1371
        %1392 = vmatmul.f32.gmra.mxu0 %v1374
        %v1393 = vpop.f32.mrf.mxu0
        %v1394 = vadd.f32 0.0, %v1393
        %1395 = vdwg.mxu0
        %1396 = vrot.lane.b32.xlu0 %v361, 72
        %v1397 = vpop.permute.xlu0 %1396
        %v1400 = vsel %vm368, %v1342, 0
        %1402 = vmatpush.msra.mxu0 0.0
        %1403 = vmatpush.msra.mxu0 0.0
        %1404 = vmatpush.msra.mxu0 0.0
        %1405 = vmatpush.msra.mxu0 0.0
        %1406 = vmatpush.msra.mxu0 0.0
        %1407 = vmatpush.msra.mxu0 0.0
        %1408 = vmatpush.msra.mxu0 0.0
        %1409 = vmatpush.msra.mxu0 0.0
        %1410 = vmatpush.msra.mxu0 0.0
        %1411 = vmatpush.msra.mxu0 0.0
        %1412 = vmatpush.msra.mxu0 0.0
        %1413 = vmatpush.msra.mxu0 0.0
        %1414 = vmatpush.msra.mxu0 0.0
        %1415 = vmatpush.msra.mxu0 0.0
        %1416 = vmatpush.msra.mxu0 0.0
        %1417 = vmatpush.msra.mxu0 %v1397
        %1418 = vmatmul.f32.gmra.mxu0 %v1400
        %v1419 = vpop.f32.mrf.mxu0
        %v1420 = vadd.f32 0.0, %v1419
        %1421 = vdwg.mxu0
        %1422 = vrot.lane.b32.xlu0 %v363, 72
        %v1423 = vpop.permute.xlu0 %1422
        %v1426 = vsel %vm368, %v1343, 0
        %1428 = vmatpush.msra.mxu0 0.0
        %1429 = vmatpush.msra.mxu0 0.0
        %1430 = vmatpush.msra.mxu0 0.0
        %1431 = vmatpush.msra.mxu0 0.0
        %1432 = vmatpush.msra.mxu0 0.0
        %1433 = vmatpush.msra.mxu0 0.0
        %1434 = vmatpush.msra.mxu0 0.0
        %1435 = vmatpush.msra.mxu0 0.0
        %1436 = vmatpush.msra.mxu0 0.0
        %1437 = vmatpush.msra.mxu0 0.0
        %1438 = vmatpush.msra.mxu0 0.0
        %1439 = vmatpush.msra.mxu0 0.0
        %1440 = vmatpush.msra.mxu0 0.0
        %1441 = vmatpush.msra.mxu0 0.0
        %1442 = vmatpush.msra.mxu0 0.0
        %1443 = vmatpush.msra.mxu0 %v1423
        %1444 = vmatmul.f32.gmra.mxu0 %v1426
        %v1445 = vpop.f32.mrf.mxu0
        %v1446 = vadd.f32 0.0, %v1445
        %1447 = vdwg.mxu0
        %1452 = vrot.lane.b32.xlu0 %v1368, 24
        %v1453 = vpop.permute.xlu0 %1452
        %1454 = vrot.lane.b32.xlu0 %v1394, 24
        %v1455 = vpop.permute.xlu0 %1454
        %1456 = vrot.lane.b32.xlu0 %v1420, 24
        %v1457 = vpop.permute.xlu0 %1456
        %1458 = vrot.lane.b32.xlu0 %v1446, 24
        %v1459 = vpop.permute.xlu0 %1458
        %vm1464 = vcmask 261312
        %1465 = vst.msk [vmem:[#allocation2] sm:$0xff] %vm1464, %v1453
        %1466 = vst.msk [vmem:[#allocation2 + $0x8] sm:$0xff] %vm1464, %v1455
        %1467 = vst.msk [vmem:[#allocation2 + $0x10] sm:$0xff] %vm1464, %v1457
        %1468 = vst.msk [vmem:[#allocation2 + $0x18] sm:$0xff] %vm1464, %v1459
        %v1469 = vld [vmem:[#allocation2] sm:$0xff]
        %v1470 = vld [vmem:[#allocation2 + $0x8] sm:$0xff]
        %v1471 = vld [vmem:[#allocation2 + $0x10] sm:$0xff]
        %v1472 = vld [vmem:[#allocation2 + $0x18] sm:$0xff]
        %v1473 = vpack.c.bf16 %v1470, %v1469
        %v1474 = vpack.c.bf16 %v1472, %v1471
        %v1475 = vld [vmem:[#allocation8] sm:$0xf]
        %v1476 = vld [vmem:[#allocation8 + $0x4] sm:$0xf]
        %v1477 = vld [vmem:[#allocation8 + $0x8] sm:$0xf]
        %v1478 = vld [vmem:[#allocation8 + $0xc] sm:$0xf]
        %v1479 = vld [vmem:[%s4] sm:$0x1]
        %v1481 = vperm.slane %v1479, 0
        %v1487 = vunpack.c.l.b16 %v1475
        %v1488 = vunpack.c.l.b16 %v1476
        %v1489 = vunpack.c.l.b16 %v1477
        %v1490 = vunpack.c.l.b16 %v1478
        %v1491 = vpack.c.b16 %v1488, %v1487
        %v1492 = vpack.c.b16 %v1490, %v1489
        %vm1495 = vcmask 261120
        %v1497 = vsel %vm1495, %v1473, 0
        %v1500 = vsel %vm1495, %v1474, 0
        %1502 = vmatpush.bf16.msra.mxu0 0
        %1503 = vmatpush.bf16.msra.mxu0 0
        %1504 = vmatpush.bf16.msra.mxu0 0
        %1505 = vmatpush.bf16.msra.mxu0 0
        %1506 = vmatpush.bf16.msra.mxu0 0
        %1507 = vmatpush.bf16.msra.mxu0 0
        %1508 = vmatpush.bf16.msra.mxu0 %v1492
        %1509 = vmatpush.bf16.msra.mxu0 %v1491
        %1510 = vmatmul.bf16.gmra.mxu0 %v1497
        %v1511 = vpop.f32.mrf.mxu0
        %v1512 = vadd.f32 %v1481, %v1511
        %v1513 = vpop.f32.mrf.mxu0
        %v1514 = vadd.f32 %v1481, %v1513
        %1515 = vmatmul.bf16.gmra.mxu0 %v1500
        %v1516 = vpop.f32.mrf.mxu0
        %v1517 = vadd.f32 %v1481, %v1516
        %v1518 = vpop.f32.mrf.mxu0
        %v1519 = vadd.f32 %v1481, %v1518
        %1520 = vdwg.mxu0
        %1521 = vst.msk [vmem:[%s277] sm:$0xff] %vm1495, %v1512
        %1522 = vst.msk [vmem:[%s277 + $0x8] sm:$0xff] %vm1495, %v1514
        %1523 = vst.msk [vmem:[%s277 + $0x10] sm:$0xff] %vm1495, %v1517
        %1524 = vst.msk [vmem:[%s277 + $0x18] sm:$0xff] %vm1495, %v1519
        %s1525 = sand.u32 %s141, 1
        %s1526 = scalar_lea.sflag [#allocation5], %s1525
        %s1527 = sand.u32 %s141, 1
        %s1528 = smul.addr %s1527, 32
        %s1529 = scalar_lea.vmem [#allocation9], %s1528
        // Predicated region
        $region53: #{tpu_custom_call.1} parent=39 // pred_check
          %p1530 = pneg %p151
        $region54: #{tpu_custom_call.1} parent=39 // pred_check_branch
          %1532 = sbr.rel (%p1530) target = $region56
        $region55: #{tpu_custom_call.1} parent=39 // pred_region
          %s1533 = smul.u32 4, %s23
          %1535 = vsyncadd %s1526, 0
          %s1536 = smul.addr %s1533, 8
          %s1537 = scalar_lea.hbm %s5, %s1536
          %s1538 = sshll.u32 %s1529, 4
          %s1539 = int_to_ptr.vmem [resolvable:$true] %s1538
          %s1540 = sshll.u32 %s1537, 4
          %s1541 = int_to_ptr.hbm [resolvable:$true] %s1540
          %1546 = dma.vmem_to_hbm [thread:$0]  %s1539, 512, %s1541, %s1526, 128, 128, 8
        $region56: #{tpu_custom_call.1} parent=39 // pred_fallthru
          _
      $region40: #{tpu_custom_call.1} parent=5 // pred_fallthru
        _
      %p1547 = scmp.le.s32.totalorder 2, %s18
      // Predicated region
      $region57: #{tpu_custom_call.1} parent=5 // pred_check
        %p1548 = pneg %p1547
      $region58: #{tpu_custom_call.1} parent=5 // pred_check_branch
        %1550 = sbr.rel (%p1548) target = $region60
      $region59: #{tpu_custom_call.1} parent=5 // pred_region
        %s1551 = ssub.s32 %s18, 2
        // Predicated region
        $region61: #{tpu_custom_call.1} parent=59 // pred_check
          %p1552 = pneg %p157
        $region62: #{tpu_custom_call.1} parent=59 // pred_check_branch
          %1554 = sbr.rel (%p1552) target = $region64
        $region63: #{tpu_custom_call.1} parent=59 // pred_region
          %s1555 = sand.u32 %s142, 1
          %s1556 = scalar_lea.sflag [#allocation5], %s1555
          %s1557 = sand.u32 %s142, 1
          %s1558 = smul.addr %s1557, 32
          %s1559 = scalar_lea.vmem [#allocation9], %s1558
          %1561 = dma.done %s1556, 512
        $region64: #{tpu_custom_call.1} parent=59 // pred_fallthru
          _
      $region60: #{tpu_custom_call.1} parent=5 // pred_fallthru
        _
    $region6: #{tpu_custom_call.1} parent=1 // loop_footer
      %s22 = sadd.s32 1, %s18
    $region7: #{tpu_custom_call.1} parent=1 // loop_footer_branch
      %17 = sbr.rel target = $region3
    $region8: #{tpu_custom_call.1} parent=1 // loop_exit
      _
    %1562 = vsyncpa [#allocation4], 1
    %s1563 = scalar_lea.sflag [#allocation4], 1
    %1564 = vsyncpa %s1563, 1
    %1565 = vsyncpa [#allocation7], 1
    %1566 = vsyncpa [#allocation5], 1
    %s1567 = scalar_lea.sflag [#allocation5], 1
    %1568 = vsyncpa %s1567, 1

</llo_original>
